<compile_context>
chip_gen: v6e
topology: v6e:2x2x1
jax: 0.10.0
libtpu: 0.0.40
codegen_flags: <defaults>
</compile_context>

<pallas_src>
import numpy as np
import jax
import jax.numpy as jnp
from jax.experimental import pallas as pl
from jax.experimental.pallas import tpu as pltpu


def _round_up(x, m):
    return ((x + m - 1) // m) * m


def hierarchical_reconstruction(
    node_features,            # (B, K*3) float32  -- func output, Kx1o irreps
    bead_pos,                 # (B, 3)   float32
    bead_types,               # (B,)     int32
    b2a_idcs,                 # (B, K)   int32, -1 == unused slot
    weights,                  # (B, K)   float32
    lvl_idcs_mask,            # (B, L, K) bool
    lvl_idcs_anchor_mask,     # (B, L, K) int32 (atom index of the anchor)
    atom_type2bond_lengths,   # (num_types+1, K, 1) float32 parameter
    num_atoms,                # A (== atom_pos_slices[-1])
    *,
    beads_per_block=8,        # Bb beads per grid step
    num_partials=2,           # partial accumulators (2 -> both v7x TensorCores)
):
    node_features = jnp.asarray(node_features, jnp.float32)
    bead_pos = jnp.asarray(bead_pos, jnp.float32)
    bead_types = jnp.asarray(bead_types, jnp.int32)
    b2a_idcs = jnp.asarray(b2a_idcs, jnp.int32)
    weights = jnp.asarray(weights, jnp.float32)
    lvl_idcs_mask = jnp.asarray(lvl_idcs_mask)
    lvl_idcs_anchor_mask = jnp.asarray(lvl_idcs_anchor_mask, jnp.int32)
    atom_type2bond_lengths = jnp.asarray(atom_type2bond_lengths, jnp.float32)

    B, K3 = node_features.shape
    K = K3 // 3
    L = lvl_idcs_mask.shape[1]
    A = int(num_atoms)

    Bb = max(1, min(int(beads_per_block), B))
    slots = Bb * K
    N = _round_up(slots, 128)
    A_pad = _round_up(A, 128)
    nb_needed = -(-B // Bb)
    P = max(1, min(int(num_partials), nb_needed))
    nbp = -(-nb_needed // P)
    nb = P * nbp
    B_pad = nb * Bb
    Lm1 = max(L - 1, 1)

    # ---------------- glue (plain JAX): pack / flatten per-slot operands -------
    rel = node_features.reshape(B, K, 3)
    valid = (b2a_idcs >= 0)
    bond_len = atom_type2bond_lengths[bead_types, :, 0]           # (B, K)
    wv = weights * valid.astype(jnp.float32)

    def pad_beads(x, fill):
        pad = [(0, B_pad - B)] + [(0, 0)] * (x.ndim - 1)
        return jnp.pad(x, pad, constant_values=fill)

    def slot_rows(x, fill):
        """(B_pad, K) -> (nb, N): flatten bead*slot per block, pad slots."""
        y = x.reshape(nb, slots)
        if N > slots:
            y = jnp.pad(y, ((0, 0), (0, N - slots)), constant_values=fill)
        return y

    rel_p = pad_beads(rel, 0.0)                                    # (B_pad,K,3)
    bpos_p = pad_beads(bead_pos, 0.0)                              # (B_pad,3)
    blen_p = pad_beads(bond_len, 1.0)
    wv_p = pad_beads(wv, 0.0)
    valid_p = pad_beads(valid.astype(jnp.float32), 0.0)
    b2a_p = pad_beads(b2a_idcs, -1)
    lmask_p = pad_beads(lvl_idcs_mask.astype(jnp.float32), 0.0)    # (B_pad,L,K)
    lanc_p = pad_beads(lvl_idcs_anchor_mask, -1)                   # (B_pad,L,K)

    # fused float pack (single DMA per step): rows
    #   0..2 bead position (xyz) broadcast per slot, 3 bond length,
    #   4 weight*valid, 5 valid, 6.. level masks for levels 1..L-1
    bpos_slot = jnp.broadcast_to(bpos_p[:, None, :], (B_pad, K, 3))
    frows = [
        slot_rows(bpos_slot[..., 0], 0.0),
        slot_rows(bpos_slot[..., 1], 0.0),
        slot_rows(bpos_slot[..., 2], 0.0),
        slot_rows(blen_p, 1.0),
        slot_rows(wv_p, 0.0),
        slot_rows(valid_p, 0.0),
    ]
    for lvl in range(1, L):
        frows.append(slot_rows(lmask_p[:, lvl, :], 0.0))
    F = len(frows)
    F_pad = _round_up(F, 8)
    fpack = jnp.stack(frows, axis=1)                               # (nb, F, N)
    if F_pad > F:
        fpack = jnp.pad(fpack, ((0, 0), (0, F_pad - F), (0, 0)))

    # int pack: per-level anchor atom index rows (levels 1..L-1)
    if L > 1:
        arows = [slot_rows(lanc_p[:, lvl, :], -1) for lvl in range(1, L)]
    else:
        arows = [slot_rows(jnp.full_like(b2a_p, -1), -1)]
    anc = jnp.stack(arows, axis=1)                                 # (nb,Lm1,N)

    # bead2atom index as a column (contraction-axis operand of the one-hots)
    b2a_col = slot_rows(b2a_p, -1)[..., None]                      # (nb, N, 1)

    # relative vectors, transposed to lane-dense (3, N)
    rel_flat = rel_p.reshape(nb, slots, 3)
    if N > slots:
        rel_flat = jnp.pad(rel_flat, ((0, 0), (0, N - slots), (0, 0)))
    rel_T = jnp.transpose(rel_flat, (0, 2, 1))                     # (nb, 3, N)

    # constant block-diagonal "same bead" mask (loaded into VMEM once)
    slot_bead = jnp.arange(N, dtype=jnp.int32) // K
    same_bead_f = (slot_bead[:, None] == slot_bead[None, :]).astype(jnp.float32)

    # per-atom reconstruction counts are data-independent of pos -> wrapper
    cnt = jnp.zeros((A,), jnp.float32).at[
        jnp.clip(b2a_idcs, 0, A - 1).reshape(-1)
    ].add(valid.astype(jnp.float32).reshape(-1))

    MASK_ROW0 = 6

    # ---------------- Pallas kernel: the hot path ------------------------------
    def kernel(rel_ref, fpk_ref, anc_ref, b2a_ref, sb_ref, out_ref):
        j = pl.program_id(1)

        @pl.when(j == 0)
        def _():
            out_ref[...] = jnp.zeros_like(out_ref)

        rel_v = rel_ref[0]                                   # (3, N)
        fpk = fpk_ref[0]                                     # (F_pad, N)
        ancs = anc_ref[0]                                    # (Lm1, N) int32
        b2a_c = b2a_ref[0]                                   # (N, 1) int32
        sb = sb_ref[...]                                     # (N, N) same-bead

        bpos = fpk[0:3, :]                                   # (3, N)
        blen = fpk[3:4, :]                                   # (1, N)
        wv_r = fpk[4:5, :]                                   # (1, N)
        valid_r = fpk[5:6, :]                                # (1, N)

        # normalize_b2a_rel_vec: unit vectors scaled by per-type bond lengths
        sumsq = jnp.sum(rel_v * rel_v, axis=0, keepdims=True)       # (1, N)
        rel_v = rel_v * (blen / (jnp.sqrt(sumsq) + 1e-5))

        # level 0: every valid slot starts at its bead position
        pos = valid_r * bpos                                        # (3, N)

        src_valid = (b2a_c >= 0)                                    # (N, 1)

        # hierarchical levels 1..L-1: anchor gather as a block-diagonal one-hot
        # matmul over the bead*slot lane axis (128-wide contraction).
        for lvl in range(1, L):
            anchor_row = ancs[lvl - 1:lvl, :]                       # (1, N)
            mask_row = fpk[MASK_ROW0 + lvl - 1:MASK_ROW0 + lvl, :]  # (1, N)
            anc_oh = ((b2a_c == anchor_row) & src_valid).astype(jnp.float32) * sb
            anchor_pos = jnp.dot(pos, anc_oh,
                                 preferred_element_type=jnp.float32)  # (3, N)
            pos = jnp.where(mask_row > 0.0, anchor_pos + rel_v, pos)

        # recenter: per-bead weighted CoM broadcast back via same-bead matmul
        cm = jnp.dot(pos * wv_r, sb, preferred_element_type=jnp.float32)
        pos = pos - valid_r * (cm - bpos)

        # scatter-add into the lane-dense (3, A_pad) partial accumulator
        atom_ids = jax.lax.broadcasted_iota(jnp.int32, (N, A_pad), 1)
        scat = (b2a_c == atom_ids).astype(jnp.float32)              # (N, A_pad)
        out_ref[0] += jnp.dot(pos, scat, preferred_element_type=jnp.float32)

    grid_spec = pltpu.PrefetchScalarGridSpec(
        num_scalar_prefetch=0,
        grid=(P, nbp),
        in_specs=[
            pl.BlockSpec((1, 3, N), lambda p, j: (p * nbp + j, 0, 0)),
            pl.BlockSpec((1, F_pad, N), lambda p, j: (p * nbp + j, 0, 0)),
            pl.BlockSpec((1, Lm1, N), lambda p, j: (p * nbp + j, 0, 0)),
            pl.BlockSpec((1, N, 1), lambda p, j: (p * nbp + j, 0, 0)),
            pl.BlockSpec((N, N), lambda p, j: (0, 0)),   # constant, stays resident
        ],
        out_specs=pl.BlockSpec((1, 3, A_pad), lambda p, j: (p, 0, 0)),
    )

    partial_sums = pl.pallas_call(
        kernel,
        out_shape=jax.ShapeDtypeStruct((P, 3, A_pad), jnp.float32),
        grid_spec=grid_spec,
        compiler_params=pltpu.CompilerParams(
            dimension_semantics=("parallel", "arbitrary")),
    )(rel_T, fpack, anc, b2a_col, same_bead_f)

    atom_sum = jnp.sum(partial_sums, axis=0)                 # (3, A_pad)
    # nanmean over beads = sum / count; 0/0 -> NaN for never-reconstructed atoms
    atom_pos = jnp.transpose(atom_sum)[:A, :] / cnt[:, None]
    return atom_pos


# ---------------- pure numpy reference (mirrors the torch forward) -------------
def reference(rel, bead_pos, bond_len, b2a_idcs, weights, lvl_mask, lvl_anchor, A):
    rel = np.asarray(rel, np.float64)
    bead_pos = np.asarray(bead_pos, np.float64)
    bond_len = np.asarray(bond_len, np.float64)
    B, K, _ = rel.shape
    L = lvl_mask.shape[1]
    norm = np.linalg.norm(rel, axis=-1, keepdims=True)
    rel = rel / (norm + 1e-5) * bond_len[:, :, None]
    recon = np.full((B, A, 3), np.nan)
    for b in range(B):
        idcs = b2a_idcs[b]
        rows = np.where(idcs >= 0)[0]
        recon[b, idcs[rows]] = bead_pos[b]
        for lvl in range(1, L):
            cols = np.where(lvl_mask[b, lvl])[0]
            if len(cols) == 0:
                continue
            # torch semantics: gather every anchor of the level, then scatter
            anchor_pos = recon[b, lvl_anchor[b, lvl, cols]].copy()
            recon[b, idcs[cols]] = anchor_pos + rel[b, cols]
        cm = np.zeros(3)
        for k in rows:
            cm += recon[b, idcs[k]] * weights[b, k]
        shift = cm - bead_pos[b]
        recon[b, idcs[rows]] -= shift
    return np.nanmean(recon, axis=0)


if __name__ == "__main__":
    B, K, L, A, num_types = 32, 16, 4, 64, 4

    key = jax.random.PRNGKey(0)
    k1, k2, k3 = jax.random.split(key, 3)
    node_features = jax.random.normal(k1, (B, K * 3), dtype=jnp.float32)
    bead_pos = jax.random.normal(k2, (B, 3), dtype=jnp.float32) * 5.0

    # deterministic synthetic hierarchy (bead -> atom reconstruction plan)
    b2a_idcs = np.full((B, K), -1, np.int32)
    lvl_mask = np.zeros((B, L, K), bool)
    lvl_anchor = np.zeros((B, L, K), np.int32)
    weights = np.zeros((B, K), np.float32)
    for b in range(B):
        n_b = 4 + (b % 12)                            # atoms reconstructed by bead b
        for k in range(n_b):
            b2a_idcs[b, k] = (b * 3 + k) % A
        weights[b, :n_b] = 1.0 / n_b
        for k in range(1, n_b):
            lvl = 1 + (k - 1) % (L - 1)
            anchor_slot = 0 if lvl == 1 else k - 1
            lvl_mask[b, lvl, k] = True
            lvl_anchor[b, lvl, k] = b2a_idcs[b, anchor_slot]
    bead_types = (np.arange(B) % (num_types + 1)).astype(np.int32)

    # parameter is torch.ones at init; perturb so the type->length gather is tested
    atom_type2bond_lengths = np.asarray(
        1.0 + 0.25 * jax.random.uniform(k3, (num_types + 1, K, 1)), np.float32)

    out = hierarchical_reconstruction(
        node_features,
        bead_pos,
        jnp.asarray(bead_types),
        jnp.asarray(b2a_idcs),
        jnp.asarray(weights),
        jnp.asarray(lvl_mask),
        jnp.asarray(lvl_anchor),
        jnp.asarray(atom_type2bond_lengths),
        A,
        beads_per_block=8,
        num_partials=2,
    )
    out = jax.block_until_ready(out)

    ref = reference(
        np.asarray(node_features).reshape(B, K, 3),
        np.asarray(bead_pos),
        np.asarray(atom_type2bond_lengths)[bead_types, :, 0],
        b2a_idcs, weights, lvl_mask, lvl_anchor, A,
    )
    np.testing.assert_allclose(np.asarray(out), ref, rtol=1e-4, atol=1e-4,
                               equal_nan=True)
    print("KERNEL_OK")
</pallas_src>

<mosaic_0001>
module attributes {stable_mosaic.version = 11 : i64} {
  func.func @kernel(%arg0: i32, %arg1: i32, %arg2: memref<1x3x128xf32, #tpu.memory_space<vmem>>, %arg3: memref<1x16x128xf32, #tpu.memory_space<vmem>>, %arg4: memref<1x3x128xi32, #tpu.memory_space<vmem>>, %arg5: memref<1x128x1xi32, #tpu.memory_space<vmem>>, %arg6: memref<128x128xf32, #tpu.memory_space<vmem>>, %arg7: memref<1x3x128xf32, #tpu.memory_space<vmem>>) attributes {dimension_semantics = [#tpu.dimension_semantics<parallel>, #tpu.dimension_semantics<arbitrary>], iteration_bounds = array<i64: 2, 2>, scalar_prefetch = 0 : i64, scratch_operands = 0 : i64, tpu.core_type = #tpu.core_type<tc>, window_params = [{transform_indices = @transform_0, window_bounds = array<i64: 1, 3, 128>}, {transform_indices = @transform_1, window_bounds = array<i64: 1, 16, 128>}, {transform_indices = @transform_2, window_bounds = array<i64: 1, 3, 128>}, {transform_indices = @transform_3, window_bounds = array<i64: 1, 128, 1>}, {pipeline_mode = #tpu.pipeline_mode<synchronous>, transform_indices = @transform_4, window_bounds = array<i64: 128, 128>}, {transform_indices = @transform_5, window_bounds = array<i64: 1, 3, 128>}]} {
    %c0_i32 = arith.constant 0 : i32
    %0 = arith.cmpi eq, %arg1, %c0_i32 : i32
    %1 = arith.extui %0 : i1 to i32
    %c0_i32_0 = arith.constant 0 : i32
    %2 = arith.cmpi ne, %1, %c0_i32_0 : i32
    scf.if %2 {
      %cst_30 = arith.constant 0.000000e+00 : f32
      %99 = vector.broadcast %cst_30 : f32 to vector<1x3x128xf32>
      %c0_31 = arith.constant 0 : index
      %c0_32 = arith.constant 0 : index
      %c0_33 = arith.constant 0 : index
      %100 = vector.load %arg7[%c0_31, %c0_32, %c0_33] : memref<1x3x128xf32, #tpu.memory_space<vmem>>, vector<1x3x128xf32>
      tpu.vector_store %arg7[%c0_31, %c0_32, %c0_33], %99 {strides = array<i32>} : memref<1x3x128xf32, #tpu.memory_space<vmem>>, vector<1x3x128xf32>,
    } else {
    }
    %c0 = arith.constant 0 : index
    %c0_1 = arith.constant 0 : index
    %c0_2 = arith.constant 0 : index
    %3 = vector.load %arg2[%c0, %c0_1, %c0_2] : memref<1x3x128xf32, #tpu.memory_space<vmem>>, vector<1x3x128xf32>
    %4 = vector.shape_cast %3 : vector<1x3x128xf32> to vector<3x128xf32>
    %c0_3 = arith.constant 0 : index
    %c0_4 = arith.constant 0 : index
    %c0_5 = arith.constant 0 : index
    %5 = vector.load %arg3[%c0_3, %c0_4, %c0_5] : memref<1x16x128xf32, #tpu.memory_space<vmem>>, vector<1x16x128xf32>
    %6 = vector.shape_cast %5 : vector<1x16x128xf32> to vector<16x128xf32>
    %c0_6 = arith.constant 0 : index
    %c0_7 = arith.constant 0 : index
    %c0_8 = arith.constant 0 : index
    %7 = vector.load %arg4[%c0_6, %c0_7, %c0_8] : memref<1x3x128xi32, #tpu.memory_space<vmem>>, vector<1x3x128xi32>
    %8 = vector.shape_cast %7 : vector<1x3x128xi32> to vector<3x128xi32>
    %c0_9 = arith.constant 0 : index
    %c0_10 = arith.constant 0 : index
    %c0_11 = arith.constant 0 : index
    %9 = vector.load %arg5[%c0_9, %c0_10, %c0_11] : memref<1x128x1xi32, #tpu.memory_space<vmem>>, vector<1x128x1xi32>
    %10 = vector.shape_cast %9 : vector<1x128x1xi32> to vector<128x1xi32>
    %c0_12 = arith.constant 0 : index
    %c0_13 = arith.constant 0 : index
    %11 = vector.load %arg6[%c0_12, %c0_13] : memref<128x128xf32, #tpu.memory_space<vmem>>, vector<128x128xf32>
    %12 = vector.extract_strided_slice %6 {offsets = [0, 0], sizes = [3, 128], strides = [1, 1]} : vector<16x128xf32> to vector<3x128xf32>
    %13 = vector.extract_strided_slice %6 {offsets = [3, 0], sizes = [1, 128], strides = [1, 1]} : vector<16x128xf32> to vector<1x128xf32>
    %14 = vector.extract_strided_slice %6 {offsets = [4, 0], sizes = [1, 128], strides = [1, 1]} : vector<16x128xf32> to vector<1x128xf32>
    %15 = vector.extract_strided_slice %6 {offsets = [5, 0], sizes = [1, 128], strides = [1, 1]} : vector<16x128xf32> to vector<1x128xf32>
    %16 = arith.mulf %4, %4 : vector<3x128xf32>
    %cst = arith.constant dense<0.000000e+00> : vector<128xf32>
    %17 = vector.multi_reduction <add>, %16, %cst [0] : vector<3x128xf32> to vector<128xf32>
    %18 = vector.shape_cast %17 : vector<128xf32> to vector<1x128xf32>
    %19 = math.sqrt %18 : vector<1x128xf32>
    %cst_14 = arith.constant 9.99999974E-6 : f32
    %20 = vector.broadcast %cst_14 : f32 to vector<1x128xf32>
    %21 = arith.addf %19, %20 : vector<1x128xf32>
    %22 = arith.divf %13, %21 : vector<1x128xf32>
    %23 = vector.broadcast %22 : vector<1x128xf32> to vector<3x128xf32>
    %24 = arith.mulf %4, %23 : vector<3x128xf32>
    %25 = vector.broadcast %15 : vector<1x128xf32> to vector<3x128xf32>
    %26 = arith.mulf %25, %12 : vector<3x128xf32>
    %c0_i32_15 = arith.constant 0 : i32
    %27 = vector.broadcast %c0_i32_15 : i32 to vector<128x1xi32>
    %28 = arith.cmpi sge, %10, %27 : vector<128x1xi32>
    %29 = vector.extract_strided_slice %8 {offsets = [0, 0], sizes = [1, 128], strides = [1, 1]} : vector<3x128xi32> to vector<1x128xi32>
    %30 = vector.extract_strided_slice %6 {offsets = [6, 0], sizes = [1, 128], strides = [1, 1]} : vector<16x128xf32> to vector<1x128xf32>
    %31 = vector.broadcast %10 : vector<128x1xi32> to vector<128x128xi32>
    %32 = vector.broadcast %29 : vector<1x128xi32> to vector<128x128xi32>
    %33 = arith.cmpi eq, %31, %32 : vector<128x128xi32>
    %34 = vector.broadcast %28 : vector<128x1xi1> to vector<128x128xi1>
    %35 = arith.andi %33, %34 : vector<128x128xi1>
    %36 = arith.extui %35 : vector<128x128xi1> to vector<128x128xi32>
    %37 = arith.sitofp %36 : vector<128x128xi32> to vector<128x128xf32>
    %38 = arith.mulf %37, %11 : vector<128x128xf32>
    %cst_16 = arith.constant dense<0.000000e+00> : vector<3x128xf32>
    %39 = tpu.matmul %26, %38, %cst_16 {dimension_numbers = #tpu.dot_dimension_numbers<[1], [0], [0], [1], [0, 0, 1, 1], [], []>} : vector<3x128xf32>, vector<128x128xf32>, vector<3x128xf32> -> vector<3x128xf32>
    %cst_17 = arith.constant 0.000000e+00 : f32
    %40 = vector.broadcast %cst_17 : f32 to vector<1x128xf32>
    %41 = arith.cmpf ogt, %30, %40 : vector<1x128xf32>
    %42 = arith.addf %39, %24 : vector<3x128xf32>
    %43 = vector.shape_cast %41 : vector<1x128xi1> to vector<1x128xi1>
    %44 = vector.broadcast %43 : vector<1x128xi1> to vector<3x128xi1>
    %45 = arith.select %44, %42, %26 : vector<3x128xi1>, vector<3x128xf32>
    %46 = vector.extract_strided_slice %8 {offsets = [1, 0], sizes = [1, 128], strides = [1, 1]} : vector<3x128xi32> to vector<1x128xi32>
    %47 = vector.extract_strided_slice %6 {offsets = [7, 0], sizes = [1, 128], strides = [1, 1]} : vector<16x128xf32> to vector<1x128xf32>
    %48 = vector.broadcast %10 : vector<128x1xi32> to vector<128x128xi32>
    %49 = vector.broadcast %46 : vector<1x128xi32> to vector<128x128xi32>
    %50 = arith.cmpi eq, %48, %49 : vector<128x128xi32>
    %51 = vector.broadcast %28 : vector<128x1xi1> to vector<128x128xi1>
    %52 = arith.andi %50, %51 : vector<128x128xi1>
    %53 = arith.extui %52 : vector<128x128xi1> to vector<128x128xi32>
    %54 = arith.sitofp %53 : vector<128x128xi32> to vector<128x128xf32>
    %55 = arith.mulf %54, %11 : vector<128x128xf32>
    %cst_18 = arith.constant dense<0.000000e+00> : vector<3x128xf32>
    %56 = tpu.matmul %45, %55, %cst_18 {dimension_numbers = #tpu.dot_dimension_numbers<[1], [0], [0], [1], [0, 0, 1, 1], [], []>} : vector<3x128xf32>, vector<128x128xf32>, vector<3x128xf32> -> vector<3x128xf32>
    %cst_19 = arith.constant 0.000000e+00 : f32
    %57 = vector.broadcast %cst_19 : f32 to vector<1x128xf32>
    %58 = arith.cmpf ogt, %47, %57 : vector<1x128xf32>
    %59 = arith.addf %56, %24 : vector<3x128xf32>
    %60 = vector.shape_cast %58 : vector<1x128xi1> to vector<1x128xi1>
    %61 = vector.broadcast %60 : vector<1x128xi1> to vector<3x128xi1>
    %62 = arith.select %61, %59, %45 : vector<3x128xi1>, vector<3x128xf32>
    %63 = vector.extract_strided_slice %8 {offsets = [2, 0], sizes = [1, 128], strides = [1, 1]} : vector<3x128xi32> to vector<1x128xi32>
    %64 = vector.extract_strided_slice %6 {offsets = [8, 0], sizes = [1, 128], strides = [1, 1]} : vector<16x128xf32> to vector<1x128xf32>
    %65 = vector.broadcast %10 : vector<128x1xi32> to vector<128x128xi32>
    %66 = vector.broadcast %63 : vector<1x128xi32> to vector<128x128xi32>
    %67 = arith.cmpi eq, %65, %66 : vector<128x128xi32>
    %68 = vector.broadcast %28 : vector<128x1xi1> to vector<128x128xi1>
    %69 = arith.andi %67, %68 : vector<128x128xi1>
    %70 = arith.extui %69 : vector<128x128xi1> to vector<128x128xi32>
    %71 = arith.sitofp %70 : vector<128x128xi32> to vector<128x128xf32>
    %72 = arith.mulf %71, %11 : vector<128x128xf32>
    %cst_20 = arith.constant dense<0.000000e+00> : vector<3x128xf32>
    %73 = tpu.matmul %62, %72, %cst_20 {dimension_numbers = #tpu.dot_dimension_numbers<[1], [0], [0], [1], [0, 0, 1, 1], [], []>} : vector<3x128xf32>, vector<128x128xf32>, vector<3x128xf32> -> vector<3x128xf32>
    %cst_21 = arith.constant 0.000000e+00 : f32
    %74 = vector.broadcast %cst_21 : f32 to vector<1x128xf32>
    %75 = arith.cmpf ogt, %64, %74 : vector<1x128xf32>
    %76 = arith.addf %73, %24 : vector<3x128xf32>
    %77 = vector.shape_cast %75 : vector<1x128xi1> to vector<1x128xi1>
    %78 = vector.broadcast %77 : vector<1x128xi1> to vector<3x128xi1>
    %79 = arith.select %78, %76, %62 : vector<3x128xi1>, vector<3x128xf32>
    %80 = vector.broadcast %14 : vector<1x128xf32> to vector<3x128xf32>
    %81 = arith.mulf %79, %80 : vector<3x128xf32>
    %cst_22 = arith.constant dense<0.000000e+00> : vector<3x128xf32>
    %82 = tpu.matmul %81, %11, %cst_22 {dimension_numbers = #tpu.dot_dimension_numbers<[1], [0], [0], [1], [0, 0, 1, 1], [], []>} : vector<3x128xf32>, vector<128x128xf32>, vector<3x128xf32> -> vector<3x128xf32>
    %83 = arith.subf %82, %12 : vector<3x128xf32>
    %84 = vector.broadcast %15 : vector<1x128xf32> to vector<3x128xf32>
    %85 = arith.mulf %84, %83 : vector<3x128xf32>
    %86 = arith.subf %79, %85 : vector<3x128xf32>
    %87 = tpu.iota {dimensions = array<i32: 1>} : vector<128x128xi32>
    %88 = vector.broadcast %10 : vector<128x1xi32> to vector<128x128xi32>
    %89 = arith.cmpi eq, %88, %87 : vector<128x128xi32>
    %90 = arith.extui %89 : vector<128x128xi1> to vector<128x128xi32>
    %91 = arith.sitofp %90 : vector<128x128xi32> to vector<128x128xf32>
    %c0_23 = arith.constant 0 : index
    %c0_24 = arith.constant 0 : index
    %c0_25 = arith.constant 0 : index
    %92 = vector.load %arg7[%c0_23, %c0_24, %c0_25] : memref<1x3x128xf32, #tpu.memory_space<vmem>>, vector<1x3x128xf32>
    %93 = vector.shape_cast %92 : vector<1x3x128xf32> to vector<3x128xf32>
    %cst_26 = arith.constant dense<0.000000e+00> : vector<3x128xf32>
    %94 = tpu.matmul %86, %91, %cst_26 {dimension_numbers = #tpu.dot_dimension_numbers<[1], [0], [0], [1], [0, 0, 1, 1], [], []>} : vector<3x128xf32>, vector<128x128xf32>, vector<3x128xf32> -> vector<3x128xf32>
    %95 = arith.addf %93, %94 : vector<3x128xf32>
    %c0_27 = arith.constant 0 : index
    %c0_28 = arith.constant 0 : index
    %c0_29 = arith.constant 0 : index
    %96 = vector.load %arg7[%c0_27, %c0_28, %c0_29] : memref<1x3x128xf32, #tpu.memory_space<vmem>>, vector<1x3x128xf32>
    %97 = vector.shape_cast %96 : vector<1x3x128xf32> to vector<3x128xf32>
    %98 = vector.shape_cast %95 : vector<3x128xf32> to vector<1x3x128xf32>
    tpu.vector_store %arg7[%c0_27, %c0_28, %c0_29], %98 {strides = array<i32>} : memref<1x3x128xf32, #tpu.memory_space<vmem>>, vector<1x3x128xf32>,
    return
  }
  func.func @transform_0(%arg0: i32, %arg1: i32) -> (i32, i32, i32) {
    %c2_i32 = arith.constant 2 : i32
    %0 = arith.muli %arg0, %c2_i32 : i32
    %1 = arith.addi %0, %arg1 : i32
    %c0_i32 = arith.constant 0 : i32
    %c0_i32_0 = arith.constant 0 : i32
    %c0_i32_1 = arith.constant 0 : i32
    return %1, %c0_i32, %c0_i32_0 : i32, i32, i32
  }
  func.func @transform_1(%arg0: i32, %arg1: i32) -> (i32, i32, i32) {
    %c2_i32 = arith.constant 2 : i32
    %0 = arith.muli %arg0, %c2_i32 : i32
    %1 = arith.addi %0, %arg1 : i32
    %c0_i32 = arith.constant 0 : i32
    %c0_i32_0 = arith.constant 0 : i32
    %c0_i32_1 = arith.constant 0 : i32
    return %1, %c0_i32, %c0_i32_0 : i32, i32, i32
  }
  func.func @transform_2(%arg0: i32, %arg1: i32) -> (i32, i32, i32) {
    %c2_i32 = arith.constant 2 : i32
    %0 = arith.muli %arg0, %c2_i32 : i32
    %1 = arith.addi %0, %arg1 : i32
    %c0_i32 = arith.constant 0 : i32
    %c0_i32_0 = arith.constant 0 : i32
    %c0_i32_1 = arith.constant 0 : i32
    return %1, %c0_i32, %c0_i32_0 : i32, i32, i32
  }
  func.func @transform_3(%arg0: i32, %arg1: i32) -> (i32, i32, i32) {
    %c2_i32 = arith.constant 2 : i32
    %0 = arith.muli %arg0, %c2_i32 : i32
    %1 = arith.addi %0, %arg1 : i32
    %c0_i32 = arith.constant 0 : i32
    %c0_i32_0 = arith.constant 0 : i32
    %c0_i32_1 = arith.constant 0 : i32
    return %1, %c0_i32, %c0_i32_0 : i32, i32, i32
  }
  func.func @transform_4(%arg0: i32, %arg1: i32) -> (i32, i32) {
    %c0_i32 = arith.constant 0 : i32
    %c0_i32_0 = arith.constant 0 : i32
    %c0_i32_1 = arith.constant 0 : i32
    return %c0_i32, %c0_i32_0 : i32, i32
  }
  func.func @transform_5(%arg0: i32, %arg1: i32) -> (i32, i32, i32) {
    %c0_i32 = arith.constant 0 : i32
    %c0_i32_0 = arith.constant 0 : i32
    %c0_i32_1 = arith.constant 0 : i32
    return %arg0, %c0_i32, %c0_i32_0 : i32, i32, i32
  }
}

</mosaic_0001>

<llo_original>
// kernel: tpu_custom_call.1
$region0: #{tpu_custom_call.1}
  #allocation0 [shape = 'u32[]', space=smem, size = 0x4, offset = 0x4, fixed_abs, tag = 'smem constant byte address 0x4 - core index']
  #allocation1 [shape = 'u32[144,128]{1,0:T(1,128)}', space=vmem, size = 0x12000, scoped, tag = 'internal scratch']
  %s0 = inlined_call_operand.vmem [shape: f32[4,3,128], index: 0, kind: input, shape index: {}]
  %s1 = inlined_call_operand.vmem [shape: f32[4,16,128], index: 1, kind: input, shape index: {}]
  %s2 = inlined_call_operand.vmem [shape: s32[4,3,128], index: 2, kind: input, shape index: {}]
  %s3 = inlined_call_operand.vmem [shape: s32[4,128,1], index: 3, kind: input, shape index: {}]
  %s4 = inlined_call_operand.vmem [shape: f32[128,128], index: 4, kind: input, shape index: {}]
  %s5 = inlined_call_operand.vmem [shape: f32[2,3,128], index: 5, kind: output, shape index: {}]
  %s6 = sld [smem:[#allocation0]]
  $region57: #{tpu_custom_call.1} parent=0
    _
  %s8 = ssub.s32 1, %s6
  %s9 = scalar_select 0, %s8, %s6
  loop: start=0, step=1, limit=6
  $region2: #{tpu_custom_call.1} parent=0 // loop_pre_header
    _
  $region3: #{tpu_custom_call.1} parent=0 // loop_header
    %s11 = sphi 0, %s15
    %p12 = scmp.ge.s32.totalorder %s11, 6
    %s18 = sphi 0, %s30
    %s19 = sphi 0, %s26
    %s20 = sphi 0, %s18
    %s21 = sphi 0, %s19
    %s22 = sphi 0, %s20
    %s23 = sphi 0, %s21
    %s37 = sphi 0, %s39
    %s40 = sphi 0, %s37
    %s41 = sphi 0, %s40
    %s57 = sphi 0, %s41
    %s67 = sphi 0, %s69
    %s70 = sphi 0, %s67
    %s71 = sphi 0, %s70
    %s87 = sphi 0, %s71
    %s97 = sphi 0, %s99
    %s100 = sphi 0, %s97
    %s101 = sphi 0, %s100
    %s117 = sphi 0, %s101
    %s127 = sphi 0, %s129
    %s130 = sphi 0, %s127
    %s131 = sphi 0, %s130
    %s147 = sphi 0, %s131
    %s151 = sphi 0, %s151
    %s153 = sphi 0, %s151
    %s154 = sphi 0, %s153
    %s168 = sphi 0, %s154
    %s174 = sphi 0, %s176
    %s177 = sphi 0, %s174
    %s178 = sphi 0, %s177
    %s194 = sphi 0, %s178
  $region4: #{tpu_custom_call.1} parent=0 // loop_header_branch
    %14 = sbr.rel (%p12) target = $region8
  $region5: #{tpu_custom_call.1} parent=0 // loop_body
    %s16 = ssub.s32 %s11, 1
    %s17 = ssub.s32 %s11, 2
    %s24 = sadd.s32 1, %s19
    %p25 = scmp.ge.s32.totalorder %s24, 2
    %s26 = scalar_select %p25, 0, %s24
    %s27 = sadd.s32 1, %s18
    %s28 = scalar_select %p25, %s27, %s18
    %p29 = scmp.ge.s32.totalorder %s28, 2
    %s30 = scalar_select %p29, 0, %s28
    %s31 = smul.u32 %s18, 2
    %s32 = sadd.s32 %s31, %s19
    %s33 = smul.u32 %s30, 2
    %s34 = sadd.s32 %s33, %s26
    %s35 = ssub.s32 %s32, %s34
    %p36 = scmp.eq.s32.totalorder %s35, 0
    %s38 = sadd.s32 %s37, 1
    %s39 = scalar_select %p36, %s37, %s38
    %p42 = pneg %p36
    %p43 = scmp.eq.s32.totalorder %s11, 3
    %p44 = por %p42, %p43
    %p45 = scmp.ne.s32.totalorder %s37, %s40
    %p46 = scmp.eq.s32.totalorder %s11, 0
    %p47 = por %p45, %p46
    %p48 = scmp.ne.s32.totalorder %s37, %s40
    %p49 = scmp.eq.s32.totalorder %s16, 3
    %p50 = por %p48, %p49
    %p51 = scmp.ne.s32.totalorder %s40, %s41
    %p52 = scmp.eq.s32.totalorder %s16, 0
    %p53 = por %p51, %p52
    %p54 = scmp.ne.s32.totalorder %s40, %s41
    %p55 = scmp.eq.s32.totalorder %s17, 3
    %p56 = por %p54, %p55
    %p58 = scmp.ne.s32.totalorder %s41, %s57
    %p59 = scmp.eq.s32.totalorder %s17, 0
    %p60 = por %p58, %p59
    %s61 = smul.u32 %s18, 2
    %s62 = sadd.s32 %s61, %s19
    %s63 = smul.u32 %s30, 2
    %s64 = sadd.s32 %s63, %s26
    %s65 = ssub.s32 %s62, %s64
    %p66 = scmp.eq.s32.totalorder %s65, 0
    %s68 = sadd.s32 %s67, 1
    %s69 = scalar_select %p66, %s67, %s68
    %p72 = pneg %p66
    %p73 = scmp.eq.s32.totalorder %s11, 3
    %p74 = por %p72, %p73
    %p75 = scmp.ne.s32.totalorder %s67, %s70
    %p76 = scmp.eq.s32.totalorder %s11, 0
    %p77 = por %p75, %p76
    %p78 = scmp.ne.s32.totalorder %s67, %s70
    %p79 = scmp.eq.s32.totalorder %s16, 3
    %p80 = por %p78, %p79
    %p81 = scmp.ne.s32.totalorder %s70, %s71
    %p82 = scmp.eq.s32.totalorder %s16, 0
    %p83 = por %p81, %p82
    %p84 = scmp.ne.s32.totalorder %s70, %s71
    %p85 = scmp.eq.s32.totalorder %s17, 3
    %p86 = por %p84, %p85
    %p88 = scmp.ne.s32.totalorder %s71, %s87
    %p89 = scmp.eq.s32.totalorder %s17, 0
    %p90 = por %p88, %p89
    %s91 = smul.u32 %s18, 2
    %s92 = sadd.s32 %s91, %s19
    %s93 = smul.u32 %s30, 2
    %s94 = sadd.s32 %s93, %s26
    %s95 = ssub.s32 %s92, %s94
    %p96 = scmp.eq.s32.totalorder %s95, 0
    %s98 = sadd.s32 %s97, 1
    %s99 = scalar_select %p96, %s97, %s98
    %p102 = pneg %p96
    %p103 = scmp.eq.s32.totalorder %s11, 3
    %p104 = por %p102, %p103
    %p105 = scmp.ne.s32.totalorder %s97, %s100
    %p106 = scmp.eq.s32.totalorder %s11, 0
    %p107 = por %p105, %p106
    %p108 = scmp.ne.s32.totalorder %s97, %s100
    %p109 = scmp.eq.s32.totalorder %s16, 3
    %p110 = por %p108, %p109
    %p111 = scmp.ne.s32.totalorder %s100, %s101
    %p112 = scmp.eq.s32.totalorder %s16, 0
    %p113 = por %p111, %p112
    %p114 = scmp.ne.s32.totalorder %s100, %s101
    %p115 = scmp.eq.s32.totalorder %s17, 3
    %p116 = por %p114, %p115
    %p118 = scmp.ne.s32.totalorder %s101, %s117
    %p119 = scmp.eq.s32.totalorder %s17, 0
    %p120 = por %p118, %p119
    %s121 = smul.u32 %s18, 2
    %s122 = sadd.s32 %s121, %s19
    %s123 = smul.u32 %s30, 2
    %s124 = sadd.s32 %s123, %s26
    %s125 = ssub.s32 %s122, %s124
    %p126 = scmp.eq.s32.totalorder %s125, 0
    %s128 = sadd.s32 %s127, 1
    %s129 = scalar_select %p126, %s127, %s128
    %p132 = pneg %p126
    %p133 = scmp.eq.s32.totalorder %s11, 3
    %p134 = por %p132, %p133
    %p135 = scmp.ne.s32.totalorder %s127, %s130
    %p136 = scmp.eq.s32.totalorder %s11, 0
    %p137 = por %p135, %p136
    %p138 = scmp.ne.s32.totalorder %s127, %s130
    %p139 = scmp.eq.s32.totalorder %s16, 3
    %p140 = por %p138, %p139
    %p141 = scmp.ne.s32.totalorder %s130, %s131
    %p142 = scmp.eq.s32.totalorder %s16, 0
    %p143 = por %p141, %p142
    %p144 = scmp.ne.s32.totalorder %s130, %s131
    %p145 = scmp.eq.s32.totalorder %s17, 3
    %p146 = por %p144, %p145
    %p148 = scmp.ne.s32.totalorder %s131, %s147
    %p149 = scmp.eq.s32.totalorder %s17, 0
    %p150 = por %p148, %p149
    %s152 = sadd.s32 %s151, 1
    %p155 = scmp.eq.s32.totalorder %s11, 3
    %p156 = scmp.ne.s32.totalorder %s151, %s153
    %p157 = scmp.eq.s32.totalorder %s11, 0
    %p158 = por %p156, %p157
    %p159 = scmp.ne.s32.totalorder %s151, %s153
    %p160 = scmp.eq.s32.totalorder %s16, 3
    %p161 = por %p159, %p160
    %p162 = scmp.ne.s32.totalorder %s153, %s154
    %p163 = scmp.eq.s32.totalorder %s16, 0
    %p164 = por %p162, %p163
    %p165 = scmp.ne.s32.totalorder %s153, %s154
    %p166 = scmp.eq.s32.totalorder %s17, 3
    %p167 = por %p165, %p166
    %p169 = scmp.ne.s32.totalorder %s154, %s168
    %p170 = scmp.eq.s32.totalorder %s17, 0
    %p171 = por %p169, %p170
    %s172 = ssub.s32 %s18, %s30
    %p173 = scmp.eq.s32.totalorder %s172, 0
    %s175 = sadd.s32 %s174, 1
    %s176 = scalar_select %p173, %s174, %s175
    %p179 = pneg %p173
    %p180 = scmp.eq.s32.totalorder %s11, 3
    %p181 = por %p179, %p180
    %p182 = scmp.ne.s32.totalorder %s174, %s177
    %p183 = scmp.eq.s32.totalorder %s11, 0
    %p184 = por %p182, %p183
    %p185 = scmp.ne.s32.totalorder %s174, %s177
    %p186 = scmp.eq.s32.totalorder %s16, 3
    %p187 = por %p185, %p186
    %p188 = scmp.ne.s32.totalorder %s177, %s178
    %p189 = scmp.eq.s32.totalorder %s16, 0
    %p190 = por %p188, %p189
    %p191 = scmp.ne.s32.totalorder %s177, %s178
    %p192 = scmp.eq.s32.totalorder %s17, 3
    %p193 = por %p191, %p192
    %p195 = scmp.ne.s32.totalorder %s178, %s194
    %p196 = scmp.eq.s32.totalorder %s17, 0
    %p197 = por %p195, %p196
    %p198 = scmp.le.s32.totalorder 1, %s11
    %p199 = scmp.lt.s32.totalorder %s11, 5
    %p200 = pnand %p198, %p199
    %p201 = pneg %p200
    // Predicated region
    $region9: #{tpu_custom_call.1} parent=5 // pred_check
      _
    $region10: #{tpu_custom_call.1} parent=5 // pred_check_branch
      %203 = sbr.rel (%p200) target = $region12
    $region11: #{tpu_custom_call.1} parent=5 // pred_region
      %s204 = ssub.s32 %s11, 1
      // Predicated region
      $region13: #{tpu_custom_call.1} parent=11 // pred_check
        %p205 = pneg %p164
      $region14: #{tpu_custom_call.1} parent=11 // pred_check_branch
        %207 = sbr.rel (%p205) target = $region16
      $region15: #{tpu_custom_call.1} parent=11 // pred_region
        _
      $region16: #{tpu_custom_call.1} parent=11 // pred_fallthru
        _
    $region12: #{tpu_custom_call.1} parent=5 // pred_fallthru
      _
    %p208 = scmp.lt.s32.totalorder %s11, 4
    // Predicated region
    $region17: #{tpu_custom_call.1} parent=5 // pred_check
      %p209 = pneg %p208
    $region18: #{tpu_custom_call.1} parent=5 // pred_check_branch
      %211 = sbr.rel (%p209) target = $region20
    $region19: #{tpu_custom_call.1} parent=5 // pred_region
      // Predicated region
      $region21: #{tpu_custom_call.1} parent=19 // pred_check
        %p212 = pneg %p47
      $region22: #{tpu_custom_call.1} parent=19 // pred_check_branch
        %214 = sbr.rel (%p212) target = $region24
      $region23: #{tpu_custom_call.1} parent=19 // pred_region
        %s215 = smul.u32 %s18, 2
        %s216 = sadd.s32 %s215, %s19
        %p217 = scmp.lt.s32.totalorder %s216, 3
        %s218 = scalar_select %p217, %s216, 3
        %s219 = smul.addr %s218, 4
        %s220 = scalar_lea.vmem %s0, %s219
        %s221 = smul.u32 %s18, 2
        %s222 = sadd.s32 %s221, %s19
      $region24: #{tpu_custom_call.1} parent=19 // pred_fallthru
        _
      // Predicated region
      $region25: #{tpu_custom_call.1} parent=19 // pred_check
        %p223 = pneg %p77
      $region26: #{tpu_custom_call.1} parent=19 // pred_check_branch
        %225 = sbr.rel (%p223) target = $region28
      $region27: #{tpu_custom_call.1} parent=19 // pred_region
        %s226 = smul.u32 %s18, 2
        %s227 = sadd.s32 %s226, %s19
        %p228 = scmp.lt.s32.totalorder %s227, 3
        %s229 = scalar_select %p228, %s227, 3
        %s230 = smul.addr %s229, 2
        %s231 = smul.addr %s230, 8
        %s232 = scalar_lea.vmem %s1, %s231
        %s233 = smul.u32 %s18, 2
        %s234 = sadd.s32 %s233, %s19
      $region28: #{tpu_custom_call.1} parent=19 // pred_fallthru
        _
      // Predicated region
      $region29: #{tpu_custom_call.1} parent=19 // pred_check
        %p235 = pneg %p107
      $region30: #{tpu_custom_call.1} parent=19 // pred_check_branch
        %237 = sbr.rel (%p235) target = $region32
      $region31: #{tpu_custom_call.1} parent=19 // pred_region
        %s238 = smul.u32 %s18, 2
        %s239 = sadd.s32 %s238, %s19
        %p240 = scmp.lt.s32.totalorder %s239, 3
        %s241 = scalar_select %p240, %s239, 3
        %s242 = smul.addr %s241, 4
        %s243 = scalar_lea.vmem %s2, %s242
        %s244 = smul.u32 %s18, 2
        %s245 = sadd.s32 %s244, %s19
      $region32: #{tpu_custom_call.1} parent=19 // pred_fallthru
        _
      // Predicated region
      $region33: #{tpu_custom_call.1} parent=19 // pred_check
        %p246 = pneg %p137
      $region34: #{tpu_custom_call.1} parent=19 // pred_check_branch
        %248 = sbr.rel (%p246) target = $region36
      $region35: #{tpu_custom_call.1} parent=19 // pred_region
        %s249 = smul.u32 %s18, 2
        %s250 = sadd.s32 %s249, %s19
        %p251 = scmp.lt.s32.totalorder %s250, 3
        %s252 = scalar_select %p251, %s250, 3
        %s253 = smul.addr %s252, 16
        %s254 = smul.addr %s253, 8
        %s255 = scalar_lea.vmem %s3, %s254
        %s256 = smul.u32 %s18, 2
        %s257 = sadd.s32 %s256, %s19
      $region36: #{tpu_custom_call.1} parent=19 // pred_fallthru
        _
    $region20: #{tpu_custom_call.1} parent=5 // pred_fallthru
      _
    %p258 = scmp.le.s32.totalorder 1, %s11
    %p259 = scmp.lt.s32.totalorder %s11, 5
    %p260 = pnand %p258, %p259
    %p261 = pneg %p260
    // Predicated region
    $region37: #{tpu_custom_call.1} parent=5 // pred_check
      _
    $region38: #{tpu_custom_call.1} parent=5 // pred_check_branch
      %263 = sbr.rel (%p260) target = $region40
    $region39: #{tpu_custom_call.1} parent=5 // pred_region
      %s264 = ssub.s32 %s11, 1
      %s265 = smul.u32 %s20, 2
      %s266 = sadd.s32 %s265, %s21
      %p267 = scmp.lt.s32.totalorder %s266, 3
      %s268 = scalar_select %p267, %s266, 3
      %s269 = smul.addr %s268, 4
      %s270 = scalar_lea.vmem %s0, %s269
      %p271 = pneg %p53
      %p272 = pneg %p50
      %s273 = smul.u32 %s20, 2
      %s274 = sadd.s32 %s273, %s21
      %p275 = scmp.lt.s32.totalorder %s274, 3
      %s276 = scalar_select %p275, %s274, 3
      %s277 = smul.addr %s276, 2
      %s278 = smul.addr %s277, 8
      %s279 = scalar_lea.vmem %s1, %s278
      %p280 = pneg %p83
      %p281 = pneg %p80
      %s282 = smul.u32 %s20, 2
      %s283 = sadd.s32 %s282, %s21
      %p284 = scmp.lt.s32.totalorder %s283, 3
      %s285 = scalar_select %p284, %s283, 3
      %s286 = smul.addr %s285, 4
      %s287 = scalar_lea.vmem %s2, %s286
      %p288 = pneg %p113
      %p289 = pneg %p110
      %s290 = smul.u32 %s20, 2
      %s291 = sadd.s32 %s290, %s21
      %p292 = scmp.lt.s32.totalorder %s291, 3
      %s293 = scalar_select %p292, %s291, 3
      %s294 = smul.addr %s293, 16
      %s295 = smul.addr %s294, 8
      %s296 = scalar_lea.vmem %s3, %s295
      %p297 = pneg %p143
      %p298 = pneg %p140
      %p299 = pneg %p164
      %p300 = pneg %p161
      %p301 = pneg %p190
      %p302 = pneg %p187
      %p303 = scmp.lt.s32.totalorder %s20, 1
      %s304 = scalar_select %p303, %s20, 1
      %s305 = smul.addr %s304, 4
      %s306 = scalar_lea.vmem %s5, %s305
      %s307 = smul.u32 %s20, 2
      %s308 = sadd.s32 %s307, %s21
      %p309 = scmp.lt.s32.totalorder %s308, 3
      %s310 = scalar_select %p309, %s308, 3
      %s311 = smul.addr %s310, 4
      %s312 = scalar_lea.vmem %s0, %s311
      %s313 = smul.u32 %s20, 2
      %s314 = sadd.s32 %s313, %s21
      %s315 = smul.u32 %s20, 2
      %s316 = sadd.s32 %s315, %s21
      %p317 = scmp.lt.s32.totalorder %s316, 3
      %s318 = scalar_select %p317, %s316, 3
      %s319 = smul.addr %s318, 2
      %s320 = smul.addr %s319, 8
      %s321 = scalar_lea.vmem %s1, %s320
      %s322 = smul.u32 %s20, 2
      %s323 = sadd.s32 %s322, %s21
      %s324 = smul.u32 %s20, 2
      %s325 = sadd.s32 %s324, %s21
      %p326 = scmp.lt.s32.totalorder %s325, 3
      %s327 = scalar_select %p326, %s325, 3
      %s328 = smul.addr %s327, 4
      %s329 = scalar_lea.vmem %s2, %s328
      %s330 = smul.u32 %s20, 2
      %s331 = sadd.s32 %s330, %s21
      %s332 = smul.u32 %s20, 2
      %s333 = sadd.s32 %s332, %s21
      %p334 = scmp.lt.s32.totalorder %s333, 3
      %s335 = scalar_select %p334, %s333, 3
      %s336 = smul.addr %s335, 16
      %s337 = smul.addr %s336, 8
      %s338 = scalar_lea.vmem %s3, %s337
      %s339 = smul.u32 %s20, 2
      %s340 = sadd.s32 %s339, %s21
      %p341 = scmp.lt.s32.totalorder %s20, 1
      %s342 = scalar_select %p341, %s20, 1
      %s343 = smul.addr %s342, 4
      %s344 = scalar_lea.vmem %s5, %s343
      %p345 = scmp.eq.s32.totalorder %s21, 0
      // Predicated region
      $region41: #{tpu_custom_call.1} parent=39 // pred_check
        %p346 = pneg %p345
      $region42: #{tpu_custom_call.1} parent=39 // pred_check_branch
        %348 = sbr.rel (%p346) target = $region44
      $region43: #{tpu_custom_call.1} parent=39 // pred_region
        %349 = vst [vmem:[%s344] sm:$0x7] 0.0
      $region44: #{tpu_custom_call.1} parent=39 // pred_fallthru
        _
      %v350 = vld [vmem:[%s312] sm:$0x7]
      %v351 = vld [vmem:[%s321] sm:$0xff]
      %v352 = vld [vmem:[%s321 + $0x8] sm:$0xff]
      %v353 = vld [vmem:[%s329] sm:$0x7]
      %v354 = vld [vmem:[%s338] sm:$0xff]
      %v355 = vld [vmem:[%s338 + $0x8] sm:$0xff]
      %v356 = vld [vmem:[%s338 + $0x10] sm:$0xff]
      %v357 = vld [vmem:[%s338 + $0x18] sm:$0xff]
      %v358 = vld [vmem:[%s338 + $0x20] sm:$0xff]
      %v359 = vld [vmem:[%s338 + $0x28] sm:$0xff]
      %v360 = vld [vmem:[%s338 + $0x30] sm:$0xff]
      %v361 = vld [vmem:[%s338 + $0x38] sm:$0xff]
      %v362 = vld [vmem:[%s338 + $0x40] sm:$0xff]
      %v363 = vld [vmem:[%s338 + $0x48] sm:$0xff]
      %v364 = vld [vmem:[%s338 + $0x50] sm:$0xff]
      %v365 = vld [vmem:[%s338 + $0x58] sm:$0xff]
      %v366 = vld [vmem:[%s338 + $0x60] sm:$0xff]
      %v367 = vld [vmem:[%s338 + $0x68] sm:$0xff]
      %v368 = vld [vmem:[%s338 + $0x70] sm:$0xff]
      %v369 = vld [vmem:[%s338 + $0x78] sm:$0xff]
      %v370 = vld [vmem:[%s4] sm:$0xff]
      %v371 = vld [vmem:[%s4 + $0x8] sm:$0xff]
      %v372 = vld [vmem:[%s4 + $0x10] sm:$0xff]
      %v373 = vld [vmem:[%s4 + $0x18] sm:$0xff]
      %v374 = vld [vmem:[%s4 + $0x20] sm:$0xff]
      %v375 = vld [vmem:[%s4 + $0x28] sm:$0xff]
      %v376 = vld [vmem:[%s4 + $0x30] sm:$0xff]
      %v377 = vld [vmem:[%s4 + $0x38] sm:$0xff]
      %v378 = vld [vmem:[%s4 + $0x40] sm:$0xff]
      %v379 = vld [vmem:[%s4 + $0x48] sm:$0xff]
      %v380 = vld [vmem:[%s4 + $0x50] sm:$0xff]
      %v381 = vld [vmem:[%s4 + $0x58] sm:$0xff]
      %v382 = vld [vmem:[%s4 + $0x60] sm:$0xff]
      %v383 = vld [vmem:[%s4 + $0x68] sm:$0xff]
      %v384 = vld [vmem:[%s4 + $0x70] sm:$0xff]
      %v385 = vld [vmem:[%s4 + $0x78] sm:$0xff]
      %v386 = vmul.f32 %v350, %v350
      %vm387 = vcmask 1042432
      %v388 = vsel %vm387, %v386, 0.0
      %v389 = vrot.slane %v388, 4
      %v390 = vadd.f32 %v388, %v389
      %v391 = vrot.slane %v390, 2
      %v392 = vadd.f32 %v390, %v391
      %v393 = vrot.slane %v392, 1
      %v394 = vadd.f32 %v392, %v393
      %v395 = vrsqrt.pop %v394
      %v396 = vmul.f32 %v394, %v395
      %vm397 = vcmp.eq.f32.partialorder %v394, inf
      %v398 = vsel %vm397, %v394, %v396
      %vm399 = vcmp.eq.f32.partialorder %v394, 0.0
      %v400 = vand.u32 %v394, 2147483648
      %v401 = vsel %vm399, %v400, %v398
      %v402 = vadd.f32 %v401, 1e-05
      %v403 = vrcp.pop %v402
      %v404 = vmul.f32 %v351, %v403
      %v405 = vlaneseq
      %v406 = vshrl.u32 %v405, 7
      %v407 = vsub.s32 3, %v406
      %v408 = vrot.slane %v404, %v407
      %v409 = vmul.f32 %v350, %v408
      %v410 = vlaneseq
      %v411 = vshrl.u32 %v410, 7
      %v412 = vsub.s32 5, %v411
      %v413 = vrot.slane %v351, %v412
      %v414 = vmul.f32 %v413, %v351
      %vm415 = vcmp.ge.s32.totalorder %v354, 0
      %vm416 = vcmp.ge.s32.totalorder %v355, 0
      %vm417 = vcmp.ge.s32.totalorder %v356, 0
      %vm418 = vcmp.ge.s32.totalorder %v357, 0
      %vm419 = vcmp.ge.s32.totalorder %v358, 0
      %vm420 = vcmp.ge.s32.totalorder %v359, 0
      %vm421 = vcmp.ge.s32.totalorder %v360, 0
      %vm422 = vcmp.ge.s32.totalorder %v361, 0
      %vm423 = vcmp.ge.s32.totalorder %v362, 0
      %vm424 = vcmp.ge.s32.totalorder %v363, 0
      %vm425 = vcmp.ge.s32.totalorder %v364, 0
      %vm426 = vcmp.ge.s32.totalorder %v365, 0
      %vm427 = vcmp.ge.s32.totalorder %v366, 0
      %vm428 = vcmp.ge.s32.totalorder %v367, 0
      %vm429 = vcmp.ge.s32.totalorder %v368, 0
      %vm430 = vcmp.ge.s32.totalorder %v369, 0
      %431 = vset.pattern.permute.xlu0 0
      %432 = vperm.xlu0 %431, %v354
      %v433 = vpop.permute.xlu0 %432
      %434 = vset.pattern.permute.xlu0 0
      %435 = vperm.xlu0 %434, %v355
      %v436 = vpop.permute.xlu0 %435
      %437 = vset.pattern.permute.xlu0 0
      %438 = vperm.xlu0 %437, %v356
      %v439 = vpop.permute.xlu0 %438
      %440 = vset.pattern.permute.xlu0 0
      %441 = vperm.xlu0 %440, %v357
      %v442 = vpop.permute.xlu0 %441
      %443 = vset.pattern.permute.xlu0 0
      %444 = vperm.xlu0 %443, %v358
      %v445 = vpop.permute.xlu0 %444
      %446 = vset.pattern.permute.xlu0 0
      %447 = vperm.xlu0 %446, %v359
      %v448 = vpop.permute.xlu0 %447
      %449 = vset.pattern.permute.xlu0 0
      %450 = vperm.xlu0 %449, %v360
      %v451 = vpop.permute.xlu0 %450
      %452 = vset.pattern.permute.xlu0 0
      %453 = vperm.xlu0 %452, %v361
      %v454 = vpop.permute.xlu0 %453
      %455 = vset.pattern.permute.xlu0 0
      %456 = vperm.xlu0 %455, %v362
      %v457 = vpop.permute.xlu0 %456
      %458 = vset.pattern.permute.xlu0 0
      %459 = vperm.xlu0 %458, %v363
      %v460 = vpop.permute.xlu0 %459
      %461 = vset.pattern.permute.xlu0 0
      %462 = vperm.xlu0 %461, %v364
      %v463 = vpop.permute.xlu0 %462
      %464 = vset.pattern.permute.xlu0 0
      %465 = vperm.xlu0 %464, %v365
      %v466 = vpop.permute.xlu0 %465
      %467 = vset.pattern.permute.xlu0 0
      %468 = vperm.xlu0 %467, %v366
      %v469 = vpop.permute.xlu0 %468
      %470 = vset.pattern.permute.xlu0 0
      %471 = vperm.xlu0 %470, %v367
      %v472 = vpop.permute.xlu0 %471
      %473 = vset.pattern.permute.xlu0 0
      %474 = vperm.xlu0 %473, %v368
      %v475 = vpop.permute.xlu0 %474
      %476 = vset.pattern.permute.xlu0 0
      %477 = vperm.xlu0 %476, %v369
      %v478 = vpop.permute.xlu0 %477
      %v479 = vlaneseq
      %v480 = vshrl.u32 %v479, 7
      %v481 = vsub.s32 0, %v480
      %v482 = vrot.slane %v353, %v481
      %vm483 = vcmp.eq.s32.totalorder %v433, %v482
      %vm484 = vcmp.eq.s32.totalorder %v436, %v482
      %vm485 = vcmp.eq.s32.totalorder %v439, %v482
      %vm486 = vcmp.eq.s32.totalorder %v442, %v482
      %vm487 = vcmp.eq.s32.totalorder %v445, %v482
      %vm488 = vcmp.eq.s32.totalorder %v448, %v482
      %vm489 = vcmp.eq.s32.totalorder %v451, %v482
      %vm490 = vcmp.eq.s32.totalorder %v454, %v482
      %vm491 = vcmp.eq.s32.totalorder %v457, %v482
      %vm492 = vcmp.eq.s32.totalorder %v460, %v482
      %vm493 = vcmp.eq.s32.totalorder %v463, %v482
      %vm494 = vcmp.eq.s32.totalorder %v466, %v482
      %vm495 = vcmp.eq.s32.totalorder %v469, %v482
      %vm496 = vcmp.eq.s32.totalorder %v472, %v482
      %vm497 = vcmp.eq.s32.totalorder %v475, %v482
      %vm498 = vcmp.eq.s32.totalorder %v478, %v482
      %v499 = vsel %vm415, 1, 0
      %v500 = vsel %vm416, 1, 0
      %v501 = vsel %vm417, 1, 0
      %v502 = vsel %vm418, 1, 0
      %v503 = vsel %vm419, 1, 0
      %v504 = vsel %vm420, 1, 0
      %v505 = vsel %vm421, 1, 0
      %v506 = vsel %vm422, 1, 0
      %v507 = vsel %vm423, 1, 0
      %v508 = vsel %vm424, 1, 0
      %v509 = vsel %vm425, 1, 0
      %v510 = vsel %vm426, 1, 0
      %v511 = vsel %vm427, 1, 0
      %v512 = vsel %vm428, 1, 0
      %v513 = vsel %vm429, 1, 0
      %v514 = vsel %vm430, 1, 0
      %515 = vset.pattern.permute.xlu0 0
      %516 = vperm.xlu0 %515, %v499
      %v517 = vpop.permute.xlu0 %516
      %518 = vset.pattern.permute.xlu0 0
      %519 = vperm.xlu0 %518, %v500
      %v520 = vpop.permute.xlu0 %519
      %521 = vset.pattern.permute.xlu0 0
      %522 = vperm.xlu0 %521, %v501
      %v523 = vpop.permute.xlu0 %522
      %524 = vset.pattern.permute.xlu0 0
      %525 = vperm.xlu0 %524, %v502
      %v526 = vpop.permute.xlu0 %525
      %527 = vset.pattern.permute.xlu0 0
      %528 = vperm.xlu0 %527, %v503
      %v529 = vpop.permute.xlu0 %528
      %530 = vset.pattern.permute.xlu0 0
      %531 = vperm.xlu0 %530, %v504
      %v532 = vpop.permute.xlu0 %531
      %533 = vset.pattern.permute.xlu0 0
      %534 = vperm.xlu0 %533, %v505
      %v535 = vpop.permute.xlu0 %534
      %536 = vset.pattern.permute.xlu0 0
      %537 = vperm.xlu0 %536, %v506
      %v538 = vpop.permute.xlu0 %537
      %539 = vset.pattern.permute.xlu0 0
      %540 = vperm.xlu0 %539, %v507
      %v541 = vpop.permute.xlu0 %540
      %542 = vset.pattern.permute.xlu0 0
      %543 = vperm.xlu0 %542, %v508
      %v544 = vpop.permute.xlu0 %543
      %545 = vset.pattern.permute.xlu0 0
      %546 = vperm.xlu0 %545, %v509
      %v547 = vpop.permute.xlu0 %546
      %548 = vset.pattern.permute.xlu0 0
      %549 = vperm.xlu0 %548, %v510
      %v550 = vpop.permute.xlu0 %549
      %551 = vset.pattern.permute.xlu0 0
      %552 = vperm.xlu0 %551, %v511
      %v553 = vpop.permute.xlu0 %552
      %554 = vset.pattern.permute.xlu0 0
      %555 = vperm.xlu0 %554, %v512
      %v556 = vpop.permute.xlu0 %555
      %557 = vset.pattern.permute.xlu0 0
      %558 = vperm.xlu0 %557, %v513
      %v559 = vpop.permute.xlu0 %558
      %560 = vset.pattern.permute.xlu0 0
      %561 = vperm.xlu0 %560, %v514
      %v562 = vpop.permute.xlu0 %561
      %vm563 = vcmp.eq.s32.totalorder %v517, 1
      %vm564 = vcmp.eq.s32.totalorder %v520, 1
      %vm565 = vcmp.eq.s32.totalorder %v523, 1
      %vm566 = vcmp.eq.s32.totalorder %v526, 1
      %vm567 = vcmp.eq.s32.totalorder %v529, 1
      %vm568 = vcmp.eq.s32.totalorder %v532, 1
      %vm569 = vcmp.eq.s32.totalorder %v535, 1
      %vm570 = vcmp.eq.s32.totalorder %v538, 1
      %vm571 = vcmp.eq.s32.totalorder %v541, 1
      %vm572 = vcmp.eq.s32.totalorder %v544, 1
      %vm573 = vcmp.eq.s32.totalorder %v547, 1
      %vm574 = vcmp.eq.s32.totalorder %v550, 1
      %vm575 = vcmp.eq.s32.totalorder %v553, 1
      %vm576 = vcmp.eq.s32.totalorder %v556, 1
      %vm577 = vcmp.eq.s32.totalorder %v559, 1
      %vm578 = vcmp.eq.s32.totalorder %v562, 1
      %vm579 = vmand %vm483, %vm563
      %vm580 = vmand %vm484, %vm564
      %vm581 = vmand %vm485, %vm565
      %vm582 = vmand %vm486, %vm566
      %vm583 = vmand %vm487, %vm567
      %vm584 = vmand %vm488, %vm568
      %vm585 = vmand %vm489, %vm569
      %vm586 = vmand %vm490, %vm570
      %vm587 = vmand %vm491, %vm571
      %vm588 = vmand %vm492, %vm572
      %vm589 = vmand %vm493, %vm573
      %vm590 = vmand %vm494, %vm574
      %vm591 = vmand %vm495, %vm575
      %vm592 = vmand %vm496, %vm576
      %vm593 = vmand %vm497, %vm577
      %vm594 = vmand %vm498, %vm578
      %v595 = vsel %vm579, 1, 0
      %v596 = vsel %vm580, 1, 0
      %v597 = vsel %vm581, 1, 0
      %v598 = vsel %vm582, 1, 0
      %v599 = vsel %vm583, 1, 0
      %v600 = vsel %vm584, 1, 0
      %v601 = vsel %vm585, 1, 0
      %v602 = vsel %vm586, 1, 0
      %v603 = vsel %vm587, 1, 0
      %v604 = vsel %vm588, 1, 0
      %v605 = vsel %vm589, 1, 0
      %v606 = vsel %vm590, 1, 0
      %v607 = vsel %vm591, 1, 0
      %v608 = vsel %vm592, 1, 0
      %v609 = vsel %vm593, 1, 0
      %v610 = vsel %vm594, 1, 0
      %v611 = vcvt.s32.f32 %v595
      %v612 = vcvt.s32.f32 %v596
      %v613 = vcvt.s32.f32 %v597
      %v614 = vcvt.s32.f32 %v598
      %v615 = vcvt.s32.f32 %v599
      %v616 = vcvt.s32.f32 %v600
      %v617 = vcvt.s32.f32 %v601
      %v618 = vcvt.s32.f32 %v602
      %v619 = vcvt.s32.f32 %v603
      %v620 = vcvt.s32.f32 %v604
      %v621 = vcvt.s32.f32 %v605
      %v622 = vcvt.s32.f32 %v606
      %v623 = vcvt.s32.f32 %v607
      %v624 = vcvt.s32.f32 %v608
      %v625 = vcvt.s32.f32 %v609
      %v626 = vcvt.s32.f32 %v610
      %v627 = vmul.f32 %v611, %v370
      %v628 = vmul.f32 %v612, %v371
      %v629 = vmul.f32 %v613, %v372
      %v630 = vmul.f32 %v614, %v373
      %v631 = vmul.f32 %v615, %v374
      %v632 = vmul.f32 %v616, %v375
      %v633 = vmul.f32 %v617, %v376
      %v634 = vmul.f32 %v618, %v377
      %v635 = vmul.f32 %v619, %v378
      %v636 = vmul.f32 %v620, %v379
      %v637 = vmul.f32 %v621, %v380
      %v638 = vmul.f32 %v622, %v381
      %v639 = vmul.f32 %v623, %v382
      %v640 = vmul.f32 %v624, %v383
      %v641 = vmul.f32 %v625, %v384
      %v642 = vmul.f32 %v626, %v385
      %vm643 = vcmp.gt.f32.partialorder %v351, 0.0
      %644 = vmatprep.subr.mxu0 0.0
      %645 = vmatpush1.msra.mxu0 %v642
      %646 = vmatprep.subr.mxu0 0.0
      %647 = vmatpush1.msra.mxu0 %v641
      %648 = vmatprep.subr.mxu0 0.0
      %649 = vmatpush1.msra.mxu0 %v640
      %650 = vmatprep.subr.mxu0 0.0
      %651 = vmatpush1.msra.mxu0 %v639
      %652 = vmatprep.subr.mxu0 0.0
      %653 = vmatpush1.msra.mxu0 %v638
      %654 = vmatprep.subr.mxu0 0.0
      %655 = vmatpush1.msra.mxu0 %v637
      %656 = vmatprep.subr.mxu0 0.0
      %657 = vmatpush1.msra.mxu0 %v636
      %658 = vmatprep.subr.mxu0 0.0
      %659 = vmatpush1.msra.mxu0 %v635
      %660 = vmatprep.subr.mxu0 0.0
      %661 = vmatpush1.msra.mxu0 %v634
      %662 = vmatprep.subr.mxu0 0.0
      %663 = vmatpush1.msra.mxu0 %v633
      %664 = vmatprep.subr.mxu0 0.0
      %665 = vmatpush1.msra.mxu0 %v632
      %666 = vmatprep.subr.mxu0 0.0
      %667 = vmatpush1.msra.mxu0 %v631
      %668 = vmatprep.subr.mxu0 0.0
      %669 = vmatpush1.msra.mxu0 %v630
      %670 = vmatprep.subr.mxu0 0.0
      %671 = vmatpush1.msra.mxu0 %v629
      %672 = vmatprep.subr.mxu0 0.0
      %673 = vmatpush1.msra.mxu0 %v628
      %674 = vmatprep.subr.mxu0 0.0
      %675 = vmatpush1.msra.mxu0 %v627
      %676 = vmatprep.subr.mxu0 0.0
      %677 = vmatpush2.msra.mxu0 0.0
      %678 = vmatprep.subr.mxu0 0.0
      %679 = vmatpush2.msra.mxu0 0.0
      %680 = vmatprep.subr.mxu0 0.0
      %681 = vmatpush2.msra.mxu0 0.0
      %682 = vmatprep.subr.mxu0 0.0
      %683 = vmatpush2.msra.mxu0 0.0
      %684 = vmatprep.subr.mxu0 0.0
      %685 = vmatpush2.msra.mxu0 0.0
      %686 = vmatprep.subr.mxu0 0.0
      %687 = vmatpush2.msra.mxu0 0.0
      %688 = vmatprep.subr.mxu0 0.0
      %689 = vmatpush2.msra.mxu0 0.0
      %690 = vmatprep.subr.mxu0 0.0
      %691 = vmatpush2.msra.mxu0 0.0
      %692 = vmatprep.subr.mxu0 0.0
      %693 = vmatpush2.msra.mxu0 0.0
      %694 = vmatprep.subr.mxu0 0.0
      %695 = vmatpush2.msra.mxu0 0.0
      %696 = vmatprep.subr.mxu0 0.0
      %697 = vmatpush2.msra.mxu0 0.0
      %698 = vmatprep.subr.mxu0 0.0
      %699 = vmatpush2.msra.mxu0 0.0
      %700 = vmatprep.subr.mxu0 0.0
      %701 = vmatpush2.msra.mxu0 0.0
      %702 = vmatprep.subr.mxu0 0.0
      %703 = vmatpush2.msra.mxu0 0.0
      %704 = vmatprep.subr.mxu0 0.0
      %705 = vmatpush2.msra.mxu0 0.0
      %706 = vmatprep.subr.mxu0 0.0
      %707 = vmatpush2.msra.mxu0 0.0
      %708 = vmatprep.mubr.f32.mxu0 0.0
      %709 = vmatmul.mubr.f32.gmra.mxu0 %v414
      %v710 = vpop.f32.mrf.mxu0
      %v711 = vadd.f32 %v409, %v710
      %v712 = vpop.f32.mrf.mxu0
      %713 = vdwg.mxu0
      %v714 = vsel %vm643, 1, 0
      %v715 = vlaneseq
      %v716 = vshrl.u32 %v715, 7
      %v717 = vsub.s32 6, %v716
      %v718 = vrot.slane %v714, %v717
      %vm719 = vcmp.eq.s32.totalorder %v718, 1
      %v720 = vsel %vm719, %v711, %v414
      %v721 = vlaneseq
      %v722 = vshrl.u32 %v721, 7
      %v723 = vsub.s32 1, %v722
      %v724 = vrot.slane %v353, %v723
      %vm725 = vcmp.eq.s32.totalorder %v433, %v724
      %vm726 = vcmp.eq.s32.totalorder %v436, %v724
      %vm727 = vcmp.eq.s32.totalorder %v439, %v724
      %vm728 = vcmp.eq.s32.totalorder %v442, %v724
      %vm729 = vcmp.eq.s32.totalorder %v445, %v724
      %vm730 = vcmp.eq.s32.totalorder %v448, %v724
      %vm731 = vcmp.eq.s32.totalorder %v451, %v724
      %vm732 = vcmp.eq.s32.totalorder %v454, %v724
      %vm733 = vcmp.eq.s32.totalorder %v457, %v724
      %vm734 = vcmp.eq.s32.totalorder %v460, %v724
      %vm735 = vcmp.eq.s32.totalorder %v463, %v724
      %vm736 = vcmp.eq.s32.totalorder %v466, %v724
      %vm737 = vcmp.eq.s32.totalorder %v469, %v724
      %vm738 = vcmp.eq.s32.totalorder %v472, %v724
      %vm739 = vcmp.eq.s32.totalorder %v475, %v724
      %vm740 = vcmp.eq.s32.totalorder %v478, %v724
      %vm741 = vmand %vm725, %vm563
      %vm742 = vmand %vm726, %vm564
      %vm743 = vmand %vm727, %vm565
      %vm744 = vmand %vm728, %vm566
      %vm745 = vmand %vm729, %vm567
      %vm746 = vmand %vm730, %vm568
      %vm747 = vmand %vm731, %vm569
      %vm748 = vmand %vm732, %vm570
      %vm749 = vmand %vm733, %vm571
      %vm750 = vmand %vm734, %vm572
      %vm751 = vmand %vm735, %vm573
      %vm752 = vmand %vm736, %vm574
      %vm753 = vmand %vm737, %vm575
      %vm754 = vmand %vm738, %vm576
      %vm755 = vmand %vm739, %vm577
      %vm756 = vmand %vm740, %vm578
      %v757 = vsel %vm741, 1, 0
      %v758 = vsel %vm742, 1, 0
      %v759 = vsel %vm743, 1, 0
      %v760 = vsel %vm744, 1, 0
      %v761 = vsel %vm745, 1, 0
      %v762 = vsel %vm746, 1, 0
      %v763 = vsel %vm747, 1, 0
      %v764 = vsel %vm748, 1, 0
      %v765 = vsel %vm749, 1, 0
      %v766 = vsel %vm750, 1, 0
      %v767 = vsel %vm751, 1, 0
      %v768 = vsel %vm752, 1, 0
      %v769 = vsel %vm753, 1, 0
      %v770 = vsel %vm754, 1, 0
      %v771 = vsel %vm755, 1, 0
      %v772 = vsel %vm756, 1, 0
      %v773 = vcvt.s32.f32 %v757
      %v774 = vcvt.s32.f32 %v758
      %v775 = vcvt.s32.f32 %v759
      %v776 = vcvt.s32.f32 %v760
      %v777 = vcvt.s32.f32 %v761
      %v778 = vcvt.s32.f32 %v762
      %v779 = vcvt.s32.f32 %v763
      %v780 = vcvt.s32.f32 %v764
      %v781 = vcvt.s32.f32 %v765
      %v782 = vcvt.s32.f32 %v766
      %v783 = vcvt.s32.f32 %v767
      %v784 = vcvt.s32.f32 %v768
      %v785 = vcvt.s32.f32 %v769
      %v786 = vcvt.s32.f32 %v770
      %v787 = vcvt.s32.f32 %v771
      %v788 = vcvt.s32.f32 %v772
      %v789 = vmul.f32 %v773, %v370
      %v790 = vmul.f32 %v774, %v371
      %v791 = vmul.f32 %v775, %v372
      %v792 = vmul.f32 %v776, %v373
      %v793 = vmul.f32 %v777, %v374
      %v794 = vmul.f32 %v778, %v375
      %v795 = vmul.f32 %v779, %v376
      %v796 = vmul.f32 %v780, %v377
      %v797 = vmul.f32 %v781, %v378
      %v798 = vmul.f32 %v782, %v379
      %v799 = vmul.f32 %v783, %v380
      %v800 = vmul.f32 %v784, %v381
      %v801 = vmul.f32 %v785, %v382
      %v802 = vmul.f32 %v786, %v383
      %v803 = vmul.f32 %v787, %v384
      %v804 = vmul.f32 %v788, %v385
      %805 = vmatprep.subr.mxu0 0.0
      %806 = vmatpush1.msra.mxu0 %v804
      %807 = vmatprep.subr.mxu0 0.0
      %808 = vmatpush1.msra.mxu0 %v803
      %809 = vmatprep.subr.mxu0 0.0
      %810 = vmatpush1.msra.mxu0 %v802
      %811 = vmatprep.subr.mxu0 0.0
      %812 = vmatpush1.msra.mxu0 %v801
      %813 = vmatprep.subr.mxu0 0.0
      %814 = vmatpush1.msra.mxu0 %v800
      %815 = vmatprep.subr.mxu0 0.0
      %816 = vmatpush1.msra.mxu0 %v799
      %817 = vmatprep.subr.mxu0 0.0
      %818 = vmatpush1.msra.mxu0 %v798
      %819 = vmatprep.subr.mxu0 0.0
      %820 = vmatpush1.msra.mxu0 %v797
      %821 = vmatprep.subr.mxu0 0.0
      %822 = vmatpush1.msra.mxu0 %v796
      %823 = vmatprep.subr.mxu0 0.0
      %824 = vmatpush1.msra.mxu0 %v795
      %825 = vmatprep.subr.mxu0 0.0
      %826 = vmatpush1.msra.mxu0 %v794
      %827 = vmatprep.subr.mxu0 0.0
      %828 = vmatpush1.msra.mxu0 %v793
      %829 = vmatprep.subr.mxu0 0.0
      %830 = vmatpush1.msra.mxu0 %v792
      %831 = vmatprep.subr.mxu0 0.0
      %832 = vmatpush1.msra.mxu0 %v791
      %833 = vmatprep.subr.mxu0 0.0
      %834 = vmatpush1.msra.mxu0 %v790
      %835 = vmatprep.subr.mxu0 0.0
      %836 = vmatpush1.msra.mxu0 %v789
      %837 = vmatprep.subr.mxu0 0.0
      %838 = vmatpush2.msra.mxu0 0.0
      %839 = vmatprep.subr.mxu0 0.0
      %840 = vmatpush2.msra.mxu0 0.0
      %841 = vmatprep.subr.mxu0 0.0
      %842 = vmatpush2.msra.mxu0 0.0
      %843 = vmatprep.subr.mxu0 0.0
      %844 = vmatpush2.msra.mxu0 0.0
      %845 = vmatprep.subr.mxu0 0.0
      %846 = vmatpush2.msra.mxu0 0.0
      %847 = vmatprep.subr.mxu0 0.0
      %848 = vmatpush2.msra.mxu0 0.0
      %849 = vmatprep.subr.mxu0 0.0
      %850 = vmatpush2.msra.mxu0 0.0
      %851 = vmatprep.subr.mxu0 0.0
      %852 = vmatpush2.msra.mxu0 0.0
      %853 = vmatprep.subr.mxu0 0.0
      %854 = vmatpush2.msra.mxu0 0.0
      %855 = vmatprep.subr.mxu0 0.0
      %856 = vmatpush2.msra.mxu0 0.0
      %857 = vmatprep.subr.mxu0 0.0
      %858 = vmatpush2.msra.mxu0 0.0
      %859 = vmatprep.subr.mxu0 0.0
      %860 = vmatpush2.msra.mxu0 0.0
      %861 = vmatprep.subr.mxu0 0.0
      %862 = vmatpush2.msra.mxu0 0.0
      %863 = vmatprep.subr.mxu0 0.0
      %864 = vmatpush2.msra.mxu0 0.0
      %865 = vmatprep.subr.mxu0 0.0
      %866 = vmatpush2.msra.mxu0 0.0
      %867 = vmatprep.subr.mxu0 0.0
      %868 = vmatpush2.msra.mxu0 0.0
      %869 = vmatprep.mubr.f32.mxu0 0.0
      %870 = vmatmul.mubr.f32.gmra.mxu0 %v720
      %v871 = vpop.f32.mrf.mxu0
      %v872 = vadd.f32 %v409, %v871
      %v873 = vpop.f32.mrf.mxu0
      %874 = vdwg.mxu0
      %v875 = vlaneseq
      %v876 = vshrl.u32 %v875, 7
      %v877 = vsub.s32 7, %v876
      %v878 = vrot.slane %v714, %v877
      %vm879 = vcmp.eq.s32.totalorder %v878, 1
      %v880 = vsel %vm879, %v872, %v720
      %v881 = vlaneseq
      %v882 = vshrl.u32 %v881, 7
      %v883 = vsub.s32 2, %v882
      %v884 = vrot.slane %v353, %v883
      %vm885 = vcmp.eq.s32.totalorder %v433, %v884
      %vm886 = vcmp.eq.s32.totalorder %v436, %v884
      %vm887 = vcmp.eq.s32.totalorder %v439, %v884
      %vm888 = vcmp.eq.s32.totalorder %v442, %v884
      %vm889 = vcmp.eq.s32.totalorder %v445, %v884
      %vm890 = vcmp.eq.s32.totalorder %v448, %v884
      %vm891 = vcmp.eq.s32.totalorder %v451, %v884
      %vm892 = vcmp.eq.s32.totalorder %v454, %v884
      %vm893 = vcmp.eq.s32.totalorder %v457, %v884
      %vm894 = vcmp.eq.s32.totalorder %v460, %v884
      %vm895 = vcmp.eq.s32.totalorder %v463, %v884
      %vm896 = vcmp.eq.s32.totalorder %v466, %v884
      %vm897 = vcmp.eq.s32.totalorder %v469, %v884
      %vm898 = vcmp.eq.s32.totalorder %v472, %v884
      %vm899 = vcmp.eq.s32.totalorder %v475, %v884
      %vm900 = vcmp.eq.s32.totalorder %v478, %v884
      %vm901 = vmand %vm885, %vm563
      %vm902 = vmand %vm886, %vm564
      %vm903 = vmand %vm887, %vm565
      %vm904 = vmand %vm888, %vm566
      %vm905 = vmand %vm889, %vm567
      %vm906 = vmand %vm890, %vm568
      %vm907 = vmand %vm891, %vm569
      %vm908 = vmand %vm892, %vm570
      %vm909 = vmand %vm893, %vm571
      %vm910 = vmand %vm894, %vm572
      %vm911 = vmand %vm895, %vm573
      %vm912 = vmand %vm896, %vm574
      %vm913 = vmand %vm897, %vm575
      %vm914 = vmand %vm898, %vm576
      %vm915 = vmand %vm899, %vm577
      %vm916 = vmand %vm900, %vm578
      %v917 = vsel %vm901, 1, 0
      %v918 = vsel %vm902, 1, 0
      %v919 = vsel %vm903, 1, 0
      %v920 = vsel %vm904, 1, 0
      %v921 = vsel %vm905, 1, 0
      %v922 = vsel %vm906, 1, 0
      %v923 = vsel %vm907, 1, 0
      %v924 = vsel %vm908, 1, 0
      %v925 = vsel %vm909, 1, 0
      %v926 = vsel %vm910, 1, 0
      %v927 = vsel %vm911, 1, 0
      %v928 = vsel %vm912, 1, 0
      %v929 = vsel %vm913, 1, 0
      %v930 = vsel %vm914, 1, 0
      %v931 = vsel %vm915, 1, 0
      %v932 = vsel %vm916, 1, 0
      %v933 = vcvt.s32.f32 %v917
      %v934 = vcvt.s32.f32 %v918
      %v935 = vcvt.s32.f32 %v919
      %v936 = vcvt.s32.f32 %v920
      %v937 = vcvt.s32.f32 %v921
      %v938 = vcvt.s32.f32 %v922
      %v939 = vcvt.s32.f32 %v923
      %v940 = vcvt.s32.f32 %v924
      %v941 = vcvt.s32.f32 %v925
      %v942 = vcvt.s32.f32 %v926
      %v943 = vcvt.s32.f32 %v927
      %v944 = vcvt.s32.f32 %v928
      %v945 = vcvt.s32.f32 %v929
      %v946 = vcvt.s32.f32 %v930
      %v947 = vcvt.s32.f32 %v931
      %v948 = vcvt.s32.f32 %v932
      %v949 = vmul.f32 %v933, %v370
      %v950 = vmul.f32 %v934, %v371
      %v951 = vmul.f32 %v935, %v372
      %v952 = vmul.f32 %v936, %v373
      %v953 = vmul.f32 %v937, %v374
      %v954 = vmul.f32 %v938, %v375
      %v955 = vmul.f32 %v939, %v376
      %v956 = vmul.f32 %v940, %v377
      %v957 = vmul.f32 %v941, %v378
      %v958 = vmul.f32 %v942, %v379
      %v959 = vmul.f32 %v943, %v380
      %v960 = vmul.f32 %v944, %v381
      %v961 = vmul.f32 %v945, %v382
      %v962 = vmul.f32 %v946, %v383
      %v963 = vmul.f32 %v947, %v384
      %v964 = vmul.f32 %v948, %v385
      %vm965 = vcmp.gt.f32.partialorder %v352, 0.0
      %966 = vmatprep.subr.mxu0 0.0
      %967 = vmatpush1.msra.mxu0 %v964
      %968 = vmatprep.subr.mxu0 0.0
      %969 = vmatpush1.msra.mxu0 %v963
      %970 = vmatprep.subr.mxu0 0.0
      %971 = vmatpush1.msra.mxu0 %v962
      %972 = vmatprep.subr.mxu0 0.0
      %973 = vmatpush1.msra.mxu0 %v961
      %974 = vmatprep.subr.mxu0 0.0
      %975 = vmatpush1.msra.mxu0 %v960
      %976 = vmatprep.subr.mxu0 0.0
      %977 = vmatpush1.msra.mxu0 %v959
      %978 = vmatprep.subr.mxu0 0.0
      %979 = vmatpush1.msra.mxu0 %v958
      %980 = vmatprep.subr.mxu0 0.0
      %981 = vmatpush1.msra.mxu0 %v957
      %982 = vmatprep.subr.mxu0 0.0
      %983 = vmatpush1.msra.mxu0 %v956
      %984 = vmatprep.subr.mxu0 0.0
      %985 = vmatpush1.msra.mxu0 %v955
      %986 = vmatprep.subr.mxu0 0.0
      %987 = vmatpush1.msra.mxu0 %v954
      %988 = vmatprep.subr.mxu0 0.0
      %989 = vmatpush1.msra.mxu0 %v953
      %990 = vmatprep.subr.mxu0 0.0
      %991 = vmatpush1.msra.mxu0 %v952
      %992 = vmatprep.subr.mxu0 0.0
      %993 = vmatpush1.msra.mxu0 %v951
      %994 = vmatprep.subr.mxu0 0.0
      %995 = vmatpush1.msra.mxu0 %v950
      %996 = vmatprep.subr.mxu0 0.0
      %997 = vmatpush1.msra.mxu0 %v949
      %998 = vmatprep.subr.mxu0 0.0
      %999 = vmatpush2.msra.mxu0 0.0
      %1000 = vmatprep.subr.mxu0 0.0
      %1001 = vmatpush2.msra.mxu0 0.0
      %1002 = vmatprep.subr.mxu0 0.0
      %1003 = vmatpush2.msra.mxu0 0.0
      %1004 = vmatprep.subr.mxu0 0.0
      %1005 = vmatpush2.msra.mxu0 0.0
      %1006 = vmatprep.subr.mxu0 0.0
      %1007 = vmatpush2.msra.mxu0 0.0
      %1008 = vmatprep.subr.mxu0 0.0
      %1009 = vmatpush2.msra.mxu0 0.0
      %1010 = vmatprep.subr.mxu0 0.0
      %1011 = vmatpush2.msra.mxu0 0.0
      %1012 = vmatprep.subr.mxu0 0.0
      %1013 = vmatpush2.msra.mxu0 0.0
      %1014 = vmatprep.subr.mxu0 0.0
      %1015 = vmatpush2.msra.mxu0 0.0
      %1016 = vmatprep.subr.mxu0 0.0
      %1017 = vmatpush2.msra.mxu0 0.0
      %1018 = vmatprep.subr.mxu0 0.0
      %1019 = vmatpush2.msra.mxu0 0.0
      %1020 = vmatprep.subr.mxu0 0.0
      %1021 = vmatpush2.msra.mxu0 0.0
      %1022 = vmatprep.subr.mxu0 0.0
      %1023 = vmatpush2.msra.mxu0 0.0
      %1024 = vmatprep.subr.mxu0 0.0
      %1025 = vmatpush2.msra.mxu0 0.0
      %1026 = vmatprep.subr.mxu0 0.0
      %1027 = vmatpush2.msra.mxu0 0.0
      %1028 = vmatprep.subr.mxu0 0.0
      %1029 = vmatpush2.msra.mxu0 0.0
      %1030 = vmatprep.mubr.f32.mxu0 0.0
      %1031 = vmatmul.mubr.f32.gmra.mxu0 %v880
      %v1032 = vpop.f32.mrf.mxu0
      %v1033 = vadd.f32 %v409, %v1032
      %v1034 = vpop.f32.mrf.mxu0
      %1035 = vdwg.mxu0
      %v1036 = vsel %vm965, 1, 0
      %v1037 = vlaneseq
      %v1038 = vshrl.u32 %v1037, 7
      %v1039 = vsub.s32 0, %v1038
      %v1040 = vrot.slane %v1036, %v1039
      %vm1041 = vcmp.eq.s32.totalorder %v1040, 1
      %v1042 = vsel %vm1041, %v1033, %v880
      %v1043 = vlaneseq
      %v1044 = vshrl.u32 %v1043, 7
      %v1045 = vsub.s32 4, %v1044
      %v1046 = vrot.slane %v351, %v1045
      %v1047 = vmul.f32 %v1042, %v1046
      %1048 = vmatprep.subr.mxu0 0.0
      %1049 = vmatpush1.msra.mxu0 %v385
      %1050 = vmatprep.subr.mxu0 0.0
      %1051 = vmatpush1.msra.mxu0 %v384
      %1052 = vmatprep.subr.mxu0 0.0
      %1053 = vmatpush1.msra.mxu0 %v383
      %1054 = vmatprep.subr.mxu0 0.0
      %1055 = vmatpush1.msra.mxu0 %v382
      %1056 = vmatprep.subr.mxu0 0.0
      %1057 = vmatpush1.msra.mxu0 %v381
      %1058 = vmatprep.subr.mxu0 0.0
      %1059 = vmatpush1.msra.mxu0 %v380
      %1060 = vmatprep.subr.mxu0 0.0
      %1061 = vmatpush1.msra.mxu0 %v379
      %1062 = vmatprep.subr.mxu0 0.0
      %1063 = vmatpush1.msra.mxu0 %v378
      %1064 = vmatprep.subr.mxu0 0.0
      %1065 = vmatpush1.msra.mxu0 %v377
      %1066 = vmatprep.subr.mxu0 0.0
      %1067 = vmatpush1.msra.mxu0 %v376
      %1068 = vmatprep.subr.mxu0 0.0
      %1069 = vmatpush1.msra.mxu0 %v375
      %1070 = vmatprep.subr.mxu0 0.0
      %1071 = vmatpush1.msra.mxu0 %v374
      %1072 = vmatprep.subr.mxu0 0.0
      %1073 = vmatpush1.msra.mxu0 %v373
      %1074 = vmatprep.subr.mxu0 0.0
      %1075 = vmatpush1.msra.mxu0 %v372
      %1076 = vmatprep.subr.mxu0 0.0
      %1077 = vmatpush1.msra.mxu0 %v371
      %1078 = vmatprep.subr.mxu0 0.0
      %1079 = vmatpush1.msra.mxu0 %v370
      %1080 = vmatprep.subr.mxu0 0.0
      %1081 = vmatpush2.msra.mxu0 0.0
      %1082 = vmatprep.subr.mxu0 0.0
      %1083 = vmatpush2.msra.mxu0 0.0
      %1084 = vmatprep.subr.mxu0 0.0
      %1085 = vmatpush2.msra.mxu0 0.0
      %1086 = vmatprep.subr.mxu0 0.0
      %1087 = vmatpush2.msra.mxu0 0.0
      %1088 = vmatprep.subr.mxu0 0.0
      %1089 = vmatpush2.msra.mxu0 0.0
      %1090 = vmatprep.subr.mxu0 0.0
      %1091 = vmatpush2.msra.mxu0 0.0
      %1092 = vmatprep.subr.mxu0 0.0
      %1093 = vmatpush2.msra.mxu0 0.0
      %1094 = vmatprep.subr.mxu0 0.0
      %1095 = vmatpush2.msra.mxu0 0.0
      %1096 = vmatprep.subr.mxu0 0.0
      %1097 = vmatpush2.msra.mxu0 0.0
      %1098 = vmatprep.subr.mxu0 0.0
      %1099 = vmatpush2.msra.mxu0 0.0
      %1100 = vmatprep.subr.mxu0 0.0
      %1101 = vmatpush2.msra.mxu0 0.0
      %1102 = vmatprep.subr.mxu0 0.0
      %1103 = vmatpush2.msra.mxu0 0.0
      %1104 = vmatprep.subr.mxu0 0.0
      %1105 = vmatpush2.msra.mxu0 0.0
      %1106 = vmatprep.subr.mxu0 0.0
      %1107 = vmatpush2.msra.mxu0 0.0
      %1108 = vmatprep.subr.mxu0 0.0
      %1109 = vmatpush2.msra.mxu0 0.0
      %1110 = vmatprep.subr.mxu0 0.0
      %1111 = vmatpush2.msra.mxu0 0.0
      %1112 = vmatprep.mubr.f32.mxu0 0.0
      %1113 = vmatmul.mubr.f32.gmra.mxu0 %v1047
      %v1114 = vpop.f32.mrf.mxu0
      %v1115 = vadd.f32 0.0, %v1114
      %v1116 = vpop.f32.mrf.mxu0
      %1117 = vdwg.mxu0
      %v1118 = vsub.f32 %v1115, %v351
      %v1119 = vmul.f32 %v413, %v1118
      %v1120 = vsub.f32 %v1042, %v1119
      %v1121 = vlaneseq
      %v1122 = vand.u32 %v1121, 127
      %vm1123 = vcmp.eq.s32.totalorder %v433, %v1122
      %vm1124 = vcmp.eq.s32.totalorder %v436, %v1122
      %vm1125 = vcmp.eq.s32.totalorder %v439, %v1122
      %vm1126 = vcmp.eq.s32.totalorder %v442, %v1122
      %vm1127 = vcmp.eq.s32.totalorder %v445, %v1122
      %vm1128 = vcmp.eq.s32.totalorder %v448, %v1122
      %vm1129 = vcmp.eq.s32.totalorder %v451, %v1122
      %vm1130 = vcmp.eq.s32.totalorder %v454, %v1122
      %vm1131 = vcmp.eq.s32.totalorder %v457, %v1122
      %vm1132 = vcmp.eq.s32.totalorder %v460, %v1122
      %vm1133 = vcmp.eq.s32.totalorder %v463, %v1122
      %vm1134 = vcmp.eq.s32.totalorder %v466, %v1122
      %vm1135 = vcmp.eq.s32.totalorder %v469, %v1122
      %vm1136 = vcmp.eq.s32.totalorder %v472, %v1122
      %vm1137 = vcmp.eq.s32.totalorder %v475, %v1122
      %vm1138 = vcmp.eq.s32.totalorder %v478, %v1122
      %v1139 = vsel %vm1123, 1, 0
      %v1140 = vsel %vm1124, 1, 0
      %v1141 = vsel %vm1125, 1, 0
      %v1142 = vsel %vm1126, 1, 0
      %v1143 = vsel %vm1127, 1, 0
      %v1144 = vsel %vm1128, 1, 0
      %v1145 = vsel %vm1129, 1, 0
      %v1146 = vsel %vm1130, 1, 0
      %v1147 = vsel %vm1131, 1, 0
      %v1148 = vsel %vm1132, 1, 0
      %v1149 = vsel %vm1133, 1, 0
      %v1150 = vsel %vm1134, 1, 0
      %v1151 = vsel %vm1135, 1, 0
      %v1152 = vsel %vm1136, 1, 0
      %v1153 = vsel %vm1137, 1, 0
      %v1154 = vsel %vm1138, 1, 0
      %v1155 = vcvt.s32.f32 %v1139
      %v1156 = vcvt.s32.f32 %v1140
      %v1157 = vcvt.s32.f32 %v1141
      %v1158 = vcvt.s32.f32 %v1142
      %v1159 = vcvt.s32.f32 %v1143
      %v1160 = vcvt.s32.f32 %v1144
      %v1161 = vcvt.s32.f32 %v1145
      %v1162 = vcvt.s32.f32 %v1146
      %v1163 = vcvt.s32.f32 %v1147
      %v1164 = vcvt.s32.f32 %v1148
      %v1165 = vcvt.s32.f32 %v1149
      %v1166 = vcvt.s32.f32 %v1150
      %v1167 = vcvt.s32.f32 %v1151
      %v1168 = vcvt.s32.f32 %v1152
      %v1169 = vcvt.s32.f32 %v1153
      %v1170 = vcvt.s32.f32 %v1154
      %v1171 = vld [vmem:[%s344] sm:$0x7]
      %1172 = vmatprep.subr.mxu0 0.0
      %1173 = vmatpush1.msra.mxu0 %v1170
      %1174 = vmatprep.subr.mxu0 0.0
      %1175 = vmatpush1.msra.mxu0 %v1169
      %1176 = vmatprep.subr.mxu0 0.0
      %1177 = vmatpush1.msra.mxu0 %v1168
      %1178 = vmatprep.subr.mxu0 0.0
      %1179 = vmatpush1.msra.mxu0 %v1167
      %1180 = vmatprep.subr.mxu0 0.0
      %1181 = vmatpush1.msra.mxu0 %v1166
      %1182 = vmatprep.subr.mxu0 0.0
      %1183 = vmatpush1.msra.mxu0 %v1165
      %1184 = vmatprep.subr.mxu0 0.0
      %1185 = vmatpush1.msra.mxu0 %v1164
      %1186 = vmatprep.subr.mxu0 0.0
      %1187 = vmatpush1.msra.mxu0 %v1163
      %1188 = vmatprep.subr.mxu0 0.0
      %1189 = vmatpush1.msra.mxu0 %v1162
      %1190 = vmatprep.subr.mxu0 0.0
      %1191 = vmatpush1.msra.mxu0 %v1161
      %1192 = vmatprep.subr.mxu0 0.0
      %1193 = vmatpush1.msra.mxu0 %v1160
      %1194 = vmatprep.subr.mxu0 0.0
      %1195 = vmatpush1.msra.mxu0 %v1159
      %1196 = vmatprep.subr.mxu0 0.0
      %1197 = vmatpush1.msra.mxu0 %v1158
      %1198 = vmatprep.subr.mxu0 0.0
      %1199 = vmatpush1.msra.mxu0 %v1157
      %1200 = vmatprep.subr.mxu0 0.0
      %1201 = vmatpush1.msra.mxu0 %v1156
      %1202 = vmatprep.subr.mxu0 0.0
      %1203 = vmatpush1.msra.mxu0 %v1155
      %1204 = vmatprep.subr.mxu0 0.0
      %1205 = vmatpush2.msra.mxu0 0.0
      %1206 = vmatprep.subr.mxu0 0.0
      %1207 = vmatpush2.msra.mxu0 0.0
      %1208 = vmatprep.subr.mxu0 0.0
      %1209 = vmatpush2.msra.mxu0 0.0
      %1210 = vmatprep.subr.mxu0 0.0
      %1211 = vmatpush2.msra.mxu0 0.0
      %1212 = vmatprep.subr.mxu0 0.0
      %1213 = vmatpush2.msra.mxu0 0.0
      %1214 = vmatprep.subr.mxu0 0.0
      %1215 = vmatpush2.msra.mxu0 0.0
      %1216 = vmatprep.subr.mxu0 0.0
      %1217 = vmatpush2.msra.mxu0 0.0
      %1218 = vmatprep.subr.mxu0 0.0
      %1219 = vmatpush2.msra.mxu0 0.0
      %1220 = vmatprep.subr.mxu0 0.0
      %1221 = vmatpush2.msra.mxu0 0.0
      %1222 = vmatprep.subr.mxu0 0.0
      %1223 = vmatpush2.msra.mxu0 0.0
      %1224 = vmatprep.subr.mxu0 0.0
      %1225 = vmatpush2.msra.mxu0 0.0
      %1226 = vmatprep.subr.mxu0 0.0
      %1227 = vmatpush2.msra.mxu0 0.0
      %1228 = vmatprep.subr.mxu0 0.0
      %1229 = vmatpush2.msra.mxu0 0.0
      %1230 = vmatprep.subr.mxu0 0.0
      %1231 = vmatpush2.msra.mxu0 0.0
      %1232 = vmatprep.subr.mxu0 0.0
      %1233 = vmatpush2.msra.mxu0 0.0
      %1234 = vmatprep.subr.mxu0 0.0
      %1235 = vmatpush2.msra.mxu0 0.0
      %1236 = vmatprep.mubr.f32.mxu0 0.0
      %1237 = vmatmul.mubr.f32.gmra.mxu0 %v1120
      %v1238 = vpop.f32.mrf.mxu0
      %v1239 = vadd.f32 0.0, %v1238
      %v1240 = vpop.f32.mrf.mxu0
      %1241 = vdwg.mxu0
      %v1242 = vadd.f32 %v1171, %v1239
      %1243 = vst [vmem:[%s344] sm:$0x7] %v1242
      %p1244 = scmp.lt.s32.totalorder %s20, 1
      %s1245 = scalar_select %p1244, %s20, 1
      %s1246 = smul.addr %s1245, 4
      %s1247 = scalar_lea.vmem %s5, %s1246
      // Predicated region
      $region45: #{tpu_custom_call.1} parent=39 // pred_check
        %p1248 = pneg %p187
      $region46: #{tpu_custom_call.1} parent=39 // pred_check_branch
        %1250 = sbr.rel (%p1248) target = $region48
      $region47: #{tpu_custom_call.1} parent=39 // pred_region
        _
      $region48: #{tpu_custom_call.1} parent=39 // pred_fallthru
        _
    $region40: #{tpu_custom_call.1} parent=5 // pred_fallthru
      _
    %p1251 = scmp.le.s32.totalorder 2, %s11
    // Predicated region
    $region49: #{tpu_custom_call.1} parent=5 // pred_check
      %p1252 = pneg %p1251
    $region50: #{tpu_custom_call.1} parent=5 // pred_check_branch
      %1254 = sbr.rel (%p1252) target = $region52
    $region51: #{tpu_custom_call.1} parent=5 // pred_region
      %s1255 = ssub.s32 %s11, 2
      // Predicated region
      $region53: #{tpu_custom_call.1} parent=51 // pred_check
        %p1256 = pneg %p193
      $region54: #{tpu_custom_call.1} parent=51 // pred_check_branch
        %1258 = sbr.rel (%p1256) target = $region56
      $region55: #{tpu_custom_call.1} parent=51 // pred_region
        %p1259 = scmp.lt.s32.totalorder %s22, 1
        %s1260 = scalar_select %p1259, %s22, 1
        %s1261 = smul.addr %s1260, 4
        %s1262 = scalar_lea.vmem %s5, %s1261
      $region56: #{tpu_custom_call.1} parent=51 // pred_fallthru
        _
    $region52: #{tpu_custom_call.1} parent=5 // pred_fallthru
      _
  $region6: #{tpu_custom_call.1} parent=0 // loop_footer
    %s15 = sadd.s32 1, %s11
  $region7: #{tpu_custom_call.1} parent=0 // loop_footer_branch
    %10 = sbr.rel target = $region3
  $region8: #{tpu_custom_call.1} parent=0 // loop_exit
    _

</llo_original>
